<compile_context>
chip_gen: v6e
topology: v6e:2x2x1
jax: 0.10.0
libtpu: 0.0.40
codegen_flags: <defaults>
</compile_context>

<pallas_src>
import jax
import jax.numpy as jnp
from jax.experimental import pallas as pl
from jax.experimental.pallas import tpu as pltpu

D_IN = 43     # nn.Linear(43, 256)
D_HID = 256   # hidden / output feature dim
LANE = 128


def _round_up(n, m):
    return (n + m - 1) // m * m


def _vmem_limit_bytes():
    # ~3/4 of the chip's physical per-core VMEM; conservative fallback if the
    # query is unavailable.  (Setting the limit is an upper bound, not a
    # reservation, so a slightly generous value is harmless.)
    cap = None
    try:
        info_fn = getattr(pltpu, "get_tpu_info", None)
        if info_fn is not None:
            cap = getattr(info_fn(), "vmem_capacity_bytes", None)
    except Exception:
        cap = None
    if not cap:
        return 32 * 1024 * 1024
    return max(32 * 1024 * 1024, min(int(cap) * 3 // 4, 96 * 1024 * 1024))


def _pick_tb(B, N, adj_bytes_per_elt, budget):
    """Largest batch tile (<=8, divides B) whose blocks fit VMEM, preferring
    to leave >=2 grid steps so both v7x TensorCores get work."""
    def vmem_est(tb):
        blocks = 2 * tb * N * (N * adj_bytes_per_elt   # adj, double-buffered
                               + LANE * 2               # x (bf16)
                               + D_HID * 4)             # out (f32)
        interm = 3 * tb * N * D_HID * 4                 # in-kernel f32/bf16 temps
        return blocks + interm
    divs = [d for d in range(1, min(B, 8) + 1) if B % d == 0]
    fitting = [d for d in divs if vmem_est(d) <= budget] or [1]
    multi = [d for d in fitting if B // d >= 2]
    return max(multi) if multi else max(fitting)


def gcn_kernel(x_ref, adj_ref, w1_ref, b1_ref, w2_ref, b2_ref, w3_ref, b3_ref,
               wf_ref, bf_ref, out_ref):
    # x_ref  : (TB, N, d_pad) bf16        adj_ref: (TB, N, N) f32 or bf16
    # w*_ref : (in, out)      bf16        b*_ref : (1, 256)   f32
    tb, n, _ = x_ref.shape
    x = x_ref[...]
    adj = adj_ref[...].astype(jnp.bfloat16)   # cast in-kernel (no HBM pre-pass)

    def linear(h, w_ref, b_ref):
        # One fat (TB*N, K) @ (K, 256) MXU dot; f32 accumulate + f32 bias.
        hk = h.reshape(tb * n, h.shape[-1])
        z = jnp.dot(hk, w_ref[...], preferred_element_type=jnp.float32)
        z = z + b_ref[...]
        return z.reshape(tb, n, D_HID)

    h = x
    for w_ref, b_ref in ((w1_ref, b1_ref), (w2_ref, b2_ref), (w3_ref, b3_ref)):
        z = linear(h, w_ref, b_ref)
        z = jnp.einsum('bij,bjd->bid', adj, z.astype(jnp.bfloat16),
                       preferred_element_type=jnp.float32)
        h = jnp.maximum(z, 0.0).astype(jnp.bfloat16)

    out = linear(h, wf_ref, bf_ref)
    out_ref[...] = out.astype(out_ref.dtype)


@jax.jit
def net_comp_gcn(x, adj, params):
    B, N, d_in = x.shape
    w1, b1, w2, b2, w3, b3, wf, bf = params   # weights (in, out) f32, biases (1, 256) f32

    d_pad = _round_up(d_in, LANE)
    vmem_budget = _vmem_limit_bytes()

    # adj dominates VMEM: keep it f32 (no HBM copy at all) when a
    # double-buffered f32 block fits comfortably, otherwise pre-cast to bf16.
    adj_f32_fits = 2 * N * N * 4 <= vmem_budget // 4
    adj_in = adj if adj_f32_fits else adj.astype(jnp.bfloat16)
    adj_bytes = 4 if adj_f32_fits else 2

    TB = _pick_tb(B, N, adj_bytes, vmem_budget)
    grid = (B // TB,)

    # x is tiny: pad its 43-wide feature dim to a lane-dense 128 and pre-cast
    # to bf16 (padded columns are zero, padded w1 rows contribute nothing).
    x_p = jnp.pad(x, ((0, 0), (0, 0), (0, d_pad - d_in))).astype(jnp.bfloat16)
    w1_p = jnp.pad(w1, ((0, d_pad - d_in), (0, 0))).astype(jnp.bfloat16)
    w2_b = w2.astype(jnp.bfloat16)
    w3_b = w3.astype(jnp.bfloat16)
    wf_b = wf.astype(jnp.bfloat16)

    def const_spec(shape):
        return pl.BlockSpec(shape, lambda b: (0,) * len(shape))

    flops = B * (2 * N * d_pad * D_HID               # linear[0]
                 + 3 * 2 * N * D_HID * D_HID         # linear[1], linear[2], final
                 + 3 * 2 * N * N * D_HID)            # three adj propagations
    weight_bytes = (d_pad * D_HID + 3 * D_HID * D_HID) * 2 + 4 * D_HID * 4
    bytes_accessed = (B * N * d_pad * 2              # x (bf16)
                      + B * N * N * adj_bytes        # adj
                      + B * N * D_HID * 4            # out (f32)
                      + weight_bytes)

    out = pl.pallas_call(
        gcn_kernel,
        out_shape=jax.ShapeDtypeStruct((B, N, D_HID), x.dtype),
        grid_spec=pltpu.PrefetchScalarGridSpec(
            num_scalar_prefetch=0,
            grid=grid,
            in_specs=[
                pl.BlockSpec((TB, N, d_pad), lambda b: (b, 0, 0)),   # x
                pl.BlockSpec((TB, N, N), lambda b: (b, 0, 0)),       # adj
                const_spec((d_pad, D_HID)), const_spec((1, D_HID)),  # linear[0]
                const_spec((D_HID, D_HID)), const_spec((1, D_HID)),  # linear[1]
                const_spec((D_HID, D_HID)), const_spec((1, D_HID)),  # linear[2]
                const_spec((D_HID, D_HID)), const_spec((1, D_HID)),  # linear_final
            ],
            out_specs=pl.BlockSpec((TB, N, D_HID), lambda b: (b, 0, 0)),
        ),
        compiler_params=pltpu.CompilerParams(
            dimension_semantics=("parallel",),
            vmem_limit_bytes=vmem_budget,
        ),
        cost_estimate=pl.CostEstimate(
            flops=int(flops), transcendentals=0,
            bytes_accessed=int(bytes_accessed)),
    )(x_p, adj_in, w1_p, b1, w2_b, b2, w3_b, b3, wf_b, bf)

    return out


def init_params(key):
    # PyTorch-Linear-style uniform(-1/sqrt(in), 1/sqrt(in)); weights stored
    # pre-transposed as (in, out) so the kernel does plain x @ W.
    ks = jax.random.split(key, 8)

    def lin(kw, kb, din, dout):
        bound = 1.0 / jnp.sqrt(jnp.float32(din))
        w = jax.random.uniform(kw, (din, dout), jnp.float32, -bound, bound)
        b = jax.random.uniform(kb, (1, dout), jnp.float32, -bound, bound)
        return w, b

    w1, b1 = lin(ks[0], ks[1], D_IN, D_HID)
    w2, b2 = lin(ks[2], ks[3], D_HID, D_HID)
    w3, b3 = lin(ks[4], ks[5], D_HID, D_HID)
    wf, bf = lin(ks[6], ks[7], D_HID, D_HID)
    return w1, b1, w2, b2, w3, b3, wf, bf


def ref_gcn(x, adj, params):
    # Pure-JAX f32 reference of the torch forward pass.
    w1, b1, w2, b2, w3, b3, wf, bf = params
    h = x
    for w, b in ((w1, b1), (w2, b2), (w3, b3)):
        h = h @ w + b
        h = jnp.einsum('bij,bjd->bid', adj, h)
        h = jnp.maximum(h, 0.0)
    return h @ wf + bf


if __name__ == "__main__":
    B, N = 2, 128
    key = jax.random.PRNGKey(0)
    kx, kadj, kp = jax.random.split(key, 3)
    x = 0.1 * jax.random.normal(kx, (B, N, D_IN), jnp.float32)
    adj = jax.random.bernoulli(kadj, 0.3, (B, N, N)).astype(jnp.float32)
    params = init_params(kp)

    out = net_comp_gcn(x, adj, params)
    out = jax.block_until_ready(out)

    assert out.shape == (B, N, D_HID)
    assert bool(jnp.all(jnp.isfinite(out)))

    # Loose tolerance: kernel runs bf16 MXU inputs with f32 accumulation.
    ref = ref_gcn(x, adj, params)
    rel_err = float(jnp.max(jnp.abs(out - ref)) / (jnp.max(jnp.abs(ref)) + 1e-6))
    assert rel_err < 1e-1, f"mismatch vs reference: rel err {rel_err:.4f}"
    print("KERNEL_OK")
</pallas_src>

<mosaic_0001>
module attributes {stable_mosaic.version = 11 : i64} {
  func.func @gcn_kernel(%arg0: i32, %arg1: memref<1x128x128xbf16, #tpu.memory_space<vmem>>, %arg2: memref<1x128x128xf32, #tpu.memory_space<vmem>>, %arg3: memref<128x256xbf16, #tpu.memory_space<vmem>>, %arg4: memref<1x256xf32, #tpu.memory_space<vmem>>, %arg5: memref<256x256xbf16, #tpu.memory_space<vmem>>, %arg6: memref<1x256xf32, #tpu.memory_space<vmem>>, %arg7: memref<256x256xbf16, #tpu.memory_space<vmem>>, %arg8: memref<1x256xf32, #tpu.memory_space<vmem>>, %arg9: memref<256x256xbf16, #tpu.memory_space<vmem>>, %arg10: memref<1x256xf32, #tpu.memory_space<vmem>>, %arg11: memref<1x128x256xf32, #tpu.memory_space<vmem>>) attributes {dimension_semantics = [#tpu.dimension_semantics<parallel>], iteration_bounds = array<i64: 2>, scalar_prefetch = 0 : i64, scratch_operands = 0 : i64, tpu.core_type = #tpu.core_type<tc>, window_params = [{transform_indices = @transform_0, window_bounds = array<i64: 1, 128, 128>}, {transform_indices = @transform_1, window_bounds = array<i64: 1, 128, 128>}, {pipeline_mode = #tpu.pipeline_mode<synchronous>, transform_indices = @transform_2, window_bounds = array<i64: 128, 256>}, {pipeline_mode = #tpu.pipeline_mode<synchronous>, transform_indices = @transform_3, window_bounds = array<i64: 1, 256>}, {pipeline_mode = #tpu.pipeline_mode<synchronous>, transform_indices = @transform_4, window_bounds = array<i64: 256, 256>}, {pipeline_mode = #tpu.pipeline_mode<synchronous>, transform_indices = @transform_5, window_bounds = array<i64: 1, 256>}, {pipeline_mode = #tpu.pipeline_mode<synchronous>, transform_indices = @transform_6, window_bounds = array<i64: 256, 256>}, {pipeline_mode = #tpu.pipeline_mode<synchronous>, transform_indices = @transform_7, window_bounds = array<i64: 1, 256>}, {pipeline_mode = #tpu.pipeline_mode<synchronous>, transform_indices = @transform_8, window_bounds = array<i64: 256, 256>}, {pipeline_mode = #tpu.pipeline_mode<synchronous>, transform_indices = @transform_9, window_bounds = array<i64: 1, 256>}, {transform_indices = @transform_10, window_bounds = array<i64: 1, 128, 256>}]} {
    %c0 = arith.constant 0 : index
    %c0_0 = arith.constant 0 : index
    %c0_1 = arith.constant 0 : index
    %0 = vector.load %arg1[%c0, %c0_0, %c0_1] : memref<1x128x128xbf16, #tpu.memory_space<vmem>>, vector<1x128x128xbf16>
    %c0_2 = arith.constant 0 : index
    %c0_3 = arith.constant 0 : index
    %c0_4 = arith.constant 0 : index
    %1 = vector.load %arg2[%c0_2, %c0_3, %c0_4] : memref<1x128x128xf32, #tpu.memory_space<vmem>>, vector<1x128x128xf32>
    %2 = arith.truncf %1 : vector<1x128x128xf32> to vector<1x128x128xbf16>
    %3 = vector.shape_cast %0 : vector<1x128x128xbf16> to vector<128x128xbf16>
    %c0_5 = arith.constant 0 : index
    %c0_6 = arith.constant 0 : index
    %4 = vector.load %arg3[%c0_5, %c0_6] : memref<128x256xbf16, #tpu.memory_space<vmem>>, vector<128x256xbf16>
    %cst = arith.constant dense<0.000000e+00> : vector<128x256xf32>
    %5 = tpu.matmul %3, %4, %cst {dimension_numbers = #tpu.dot_dimension_numbers<[1], [0], [0], [1], [0, 0, 1, 1], [], []>} : vector<128x128xbf16>, vector<128x256xbf16>, vector<128x256xf32> -> vector<128x256xf32>
    %c0_7 = arith.constant 0 : index
    %c0_8 = arith.constant 0 : index
    %6 = vector.load %arg4[%c0_7, %c0_8] : memref<1x256xf32, #tpu.memory_space<vmem>>, vector<1x256xf32>
    %7 = vector.broadcast %6 : vector<1x256xf32> to vector<128x256xf32>
    %8 = arith.addf %5, %7 : vector<128x256xf32>
    %9 = vector.shape_cast %8 : vector<128x256xf32> to vector<1x128x256xf32>
    %10 = arith.truncf %9 : vector<1x128x256xf32> to vector<1x128x256xbf16>
    "tpu.trace_start"() <{level = 10 : i32, message = "bij,bjd->bid"}> : () -> ()
    %cst_9 = arith.constant dense<0.000000e+00> : vector<1x128x256xf32>
    %11 = tpu.matmul %2, %10, %cst_9 {dimension_numbers = #tpu.dot_dimension_numbers<[2], [1], [1], [2], [0, 0, 0, 1, 1, 2], [0], [0]>} : vector<1x128x128xbf16>, vector<1x128x256xbf16>, vector<1x128x256xf32> -> vector<1x128x256xf32>
    "tpu.trace_stop"() : () -> ()
    %cst_10 = arith.constant 0.000000e+00 : f32
    %12 = vector.broadcast %cst_10 : f32 to vector<1x128x256xf32>
    %13 = arith.maximumf %11, %12 : vector<1x128x256xf32>
    %14 = arith.truncf %13 : vector<1x128x256xf32> to vector<1x128x256xbf16>
    %15 = vector.shape_cast %14 : vector<1x128x256xbf16> to vector<128x256xbf16>
    %c0_11 = arith.constant 0 : index
    %c0_12 = arith.constant 0 : index
    %16 = vector.load %arg5[%c0_11, %c0_12] : memref<256x256xbf16, #tpu.memory_space<vmem>>, vector<256x256xbf16>
    %cst_13 = arith.constant dense<0.000000e+00> : vector<128x256xf32>
    %17 = tpu.matmul %15, %16, %cst_13 {dimension_numbers = #tpu.dot_dimension_numbers<[1], [0], [0], [1], [0, 0, 1, 1], [], []>} : vector<128x256xbf16>, vector<256x256xbf16>, vector<128x256xf32> -> vector<128x256xf32>
    %c0_14 = arith.constant 0 : index
    %c0_15 = arith.constant 0 : index
    %18 = vector.load %arg6[%c0_14, %c0_15] : memref<1x256xf32, #tpu.memory_space<vmem>>, vector<1x256xf32>
    %19 = vector.broadcast %18 : vector<1x256xf32> to vector<128x256xf32>
    %20 = arith.addf %17, %19 : vector<128x256xf32>
    %21 = vector.shape_cast %20 : vector<128x256xf32> to vector<1x128x256xf32>
    %22 = arith.truncf %21 : vector<1x128x256xf32> to vector<1x128x256xbf16>
    "tpu.trace_start"() <{level = 10 : i32, message = "bij,bjd->bid"}> : () -> ()
    %cst_16 = arith.constant dense<0.000000e+00> : vector<1x128x256xf32>
    %23 = tpu.matmul %2, %22, %cst_16 {dimension_numbers = #tpu.dot_dimension_numbers<[2], [1], [1], [2], [0, 0, 0, 1, 1, 2], [0], [0]>} : vector<1x128x128xbf16>, vector<1x128x256xbf16>, vector<1x128x256xf32> -> vector<1x128x256xf32>
    "tpu.trace_stop"() : () -> ()
    %cst_17 = arith.constant 0.000000e+00 : f32
    %24 = vector.broadcast %cst_17 : f32 to vector<1x128x256xf32>
    %25 = arith.maximumf %23, %24 : vector<1x128x256xf32>
    %26 = arith.truncf %25 : vector<1x128x256xf32> to vector<1x128x256xbf16>
    %27 = vector.shape_cast %26 : vector<1x128x256xbf16> to vector<128x256xbf16>
    %c0_18 = arith.constant 0 : index
    %c0_19 = arith.constant 0 : index
    %28 = vector.load %arg7[%c0_18, %c0_19] : memref<256x256xbf16, #tpu.memory_space<vmem>>, vector<256x256xbf16>
    %cst_20 = arith.constant dense<0.000000e+00> : vector<128x256xf32>
    %29 = tpu.matmul %27, %28, %cst_20 {dimension_numbers = #tpu.dot_dimension_numbers<[1], [0], [0], [1], [0, 0, 1, 1], [], []>} : vector<128x256xbf16>, vector<256x256xbf16>, vector<128x256xf32> -> vector<128x256xf32>
    %c0_21 = arith.constant 0 : index
    %c0_22 = arith.constant 0 : index
    %30 = vector.load %arg8[%c0_21, %c0_22] : memref<1x256xf32, #tpu.memory_space<vmem>>, vector<1x256xf32>
    %31 = vector.broadcast %30 : vector<1x256xf32> to vector<128x256xf32>
    %32 = arith.addf %29, %31 : vector<128x256xf32>
    %33 = vector.shape_cast %32 : vector<128x256xf32> to vector<1x128x256xf32>
    %34 = arith.truncf %33 : vector<1x128x256xf32> to vector<1x128x256xbf16>
    "tpu.trace_start"() <{level = 10 : i32, message = "bij,bjd->bid"}> : () -> ()
    %cst_23 = arith.constant dense<0.000000e+00> : vector<1x128x256xf32>
    %35 = tpu.matmul %2, %34, %cst_23 {dimension_numbers = #tpu.dot_dimension_numbers<[2], [1], [1], [2], [0, 0, 0, 1, 1, 2], [0], [0]>} : vector<1x128x128xbf16>, vector<1x128x256xbf16>, vector<1x128x256xf32> -> vector<1x128x256xf32>
    "tpu.trace_stop"() : () -> ()
    %cst_24 = arith.constant 0.000000e+00 : f32
    %36 = vector.broadcast %cst_24 : f32 to vector<1x128x256xf32>
    %37 = arith.maximumf %35, %36 : vector<1x128x256xf32>
    %38 = arith.truncf %37 : vector<1x128x256xf32> to vector<1x128x256xbf16>
    %39 = vector.shape_cast %38 : vector<1x128x256xbf16> to vector<128x256xbf16>
    %c0_25 = arith.constant 0 : index
    %c0_26 = arith.constant 0 : index
    %40 = vector.load %arg9[%c0_25, %c0_26] : memref<256x256xbf16, #tpu.memory_space<vmem>>, vector<256x256xbf16>
    %cst_27 = arith.constant dense<0.000000e+00> : vector<128x256xf32>
    %41 = tpu.matmul %39, %40, %cst_27 {dimension_numbers = #tpu.dot_dimension_numbers<[1], [0], [0], [1], [0, 0, 1, 1], [], []>} : vector<128x256xbf16>, vector<256x256xbf16>, vector<128x256xf32> -> vector<128x256xf32>
    %c0_28 = arith.constant 0 : index
    %c0_29 = arith.constant 0 : index
    %42 = vector.load %arg10[%c0_28, %c0_29] : memref<1x256xf32, #tpu.memory_space<vmem>>, vector<1x256xf32>
    %43 = vector.broadcast %42 : vector<1x256xf32> to vector<128x256xf32>
    %44 = arith.addf %41, %43 : vector<128x256xf32>
    %45 = vector.shape_cast %44 : vector<128x256xf32> to vector<1x128x256xf32>
    %c0_30 = arith.constant 0 : index
    %c0_31 = arith.constant 0 : index
    %c0_32 = arith.constant 0 : index
    %46 = vector.load %arg11[%c0_30, %c0_31, %c0_32] : memref<1x128x256xf32, #tpu.memory_space<vmem>>, vector<1x128x256xf32>
    tpu.vector_store %arg11[%c0_30, %c0_31, %c0_32], %45 {strides = array<i32>} : memref<1x128x256xf32, #tpu.memory_space<vmem>>, vector<1x128x256xf32>,
    return
  }
  func.func @transform_0(%arg0: i32) -> (i32, i32, i32) {
    %c0_i32 = arith.constant 0 : i32
    %c0_i32_0 = arith.constant 0 : i32
    %c0_i32_1 = arith.constant 0 : i32
    return %arg0, %c0_i32, %c0_i32_0 : i32, i32, i32
  }
  func.func @transform_1(%arg0: i32) -> (i32, i32, i32) {
    %c0_i32 = arith.constant 0 : i32
    %c0_i32_0 = arith.constant 0 : i32
    %c0_i32_1 = arith.constant 0 : i32
    return %arg0, %c0_i32, %c0_i32_0 : i32, i32, i32
  }
  func.func @transform_2(%arg0: i32) -> (i32, i32) {
    %c0_i32 = arith.constant 0 : i32
    %c0_i32_0 = arith.constant 0 : i32
    %c0_i32_1 = arith.constant 0 : i32
    return %c0_i32, %c0_i32_0 : i32, i32
  }
  func.func @transform_3(%arg0: i32) -> (i32, i32) {
    %c0_i32 = arith.constant 0 : i32
    %c0_i32_0 = arith.constant 0 : i32
    %c0_i32_1 = arith.constant 0 : i32
    return %c0_i32, %c0_i32_0 : i32, i32
  }
  func.func @transform_4(%arg0: i32) -> (i32, i32) {
    %c0_i32 = arith.constant 0 : i32
    %c0_i32_0 = arith.constant 0 : i32
    %c0_i32_1 = arith.constant 0 : i32
    return %c0_i32, %c0_i32_0 : i32, i32
  }
  func.func @transform_5(%arg0: i32) -> (i32, i32) {
    %c0_i32 = arith.constant 0 : i32
    %c0_i32_0 = arith.constant 0 : i32
    %c0_i32_1 = arith.constant 0 : i32
    return %c0_i32, %c0_i32_0 : i32, i32
  }
  func.func @transform_6(%arg0: i32) -> (i32, i32) {
    %c0_i32 = arith.constant 0 : i32
    %c0_i32_0 = arith.constant 0 : i32
    %c0_i32_1 = arith.constant 0 : i32
    return %c0_i32, %c0_i32_0 : i32, i32
  }
  func.func @transform_7(%arg0: i32) -> (i32, i32) {
    %c0_i32 = arith.constant 0 : i32
    %c0_i32_0 = arith.constant 0 : i32
    %c0_i32_1 = arith.constant 0 : i32
    return %c0_i32, %c0_i32_0 : i32, i32
  }
  func.func @transform_8(%arg0: i32) -> (i32, i32) {
    %c0_i32 = arith.constant 0 : i32
    %c0_i32_0 = arith.constant 0 : i32
    %c0_i32_1 = arith.constant 0 : i32
    return %c0_i32, %c0_i32_0 : i32, i32
  }
  func.func @transform_9(%arg0: i32) -> (i32, i32) {
    %c0_i32 = arith.constant 0 : i32
    %c0_i32_0 = arith.constant 0 : i32
    %c0_i32_1 = arith.constant 0 : i32
    return %c0_i32, %c0_i32_0 : i32, i32
  }
  func.func @transform_10(%arg0: i32) -> (i32, i32, i32) {
    %c0_i32 = arith.constant 0 : i32
    %c0_i32_0 = arith.constant 0 : i32
    %c0_i32_1 = arith.constant 0 : i32
    return %arg0, %c0_i32, %c0_i32_0 : i32, i32, i32
  }
}

</mosaic_0001>

<llo_original>
// kernel: net_comp_gcn.1
$region0: #{net_comp_gcn.1}
  #allocation0 [shape = 'u32[]', space=smem, size = 0x4, offset = 0x4, fixed_abs, tag = 'smem constant byte address 0x4 - core index']
  #allocation1 [shape = 'u32[144,128]{1,0:T(1,128)}', space=vmem, size = 0x12000, scoped, tag = 'internal scratch']
  %s0 = inlined_call_operand.vmem [shape: bf16[2,128,128], index: 0, kind: input, shape index: {}]
  %s1 = inlined_call_operand.vmem [shape: f32[2,128,128], index: 1, kind: input, shape index: {}]
  %s2 = inlined_call_operand.vmem [shape: bf16[128,256], index: 2, kind: input, shape index: {}]
  %s3 = inlined_call_operand.vmem [shape: f32[1,256], index: 3, kind: input, shape index: {}]
  %s4 = inlined_call_operand.vmem [shape: bf16[256,256], index: 4, kind: input, shape index: {}]
  %s5 = inlined_call_operand.vmem [shape: f32[1,256], index: 5, kind: input, shape index: {}]
  %s6 = inlined_call_operand.vmem [shape: bf16[256,256], index: 6, kind: input, shape index: {}]
  %s7 = inlined_call_operand.vmem [shape: f32[1,256], index: 7, kind: input, shape index: {}]
  %s8 = inlined_call_operand.vmem [shape: bf16[256,256], index: 8, kind: input, shape index: {}]
  %s9 = inlined_call_operand.vmem [shape: f32[1,256], index: 9, kind: input, shape index: {}]
  %s10 = inlined_call_operand.hbm [shape: f32[2,128,256], index: 10, kind: output, shape index: {}]
  %s11 = sld [smem:[#allocation0]]
  $region73: #{net_comp_gcn.1} parent=0
    _
  %s13 = ssub.s32 1, %s11
  %s14 = scalar_select 0, %s13, %s11
  $region1: #{net_comp_gcn.1} parent=0
    #allocation2 [shape = 'u8[262144]{0}', space=vmem, size = 0x40000, scoped, tag = 'output window, operand 0']
    #allocation3 [shape = 's32[2]{0}', space=sflag, size = 0x8, scoped, tag = 'scoped memory for net_comp_gcn.1']
    %15 = vsyncpa [#allocation3], 0
    %s16 = scalar_lea.sflag [#allocation3], 1
    %17 = vsyncpa %s16, 0
    loop: start=0, step=1, limit=4
    $region2: #{net_comp_gcn.1} parent=1 // loop_pre_header
      _
    $region3: #{net_comp_gcn.1} parent=1 // loop_header
      %s19 = sphi 0, %s23
      %p20 = scmp.ge.s32.totalorder %s19, 4
      %s29 = sphi 0, %s31
      %s32 = sphi 0, %s29
      %s33 = sphi 0, %s32
      %s49 = sphi 0, %s33
      %s55 = sphi 0, %s57
      %s58 = sphi 0, %s55
      %s59 = sphi 0, %s58
      %s75 = sphi 0, %s59
      %s79 = sphi 0, %s79
      %s81 = sphi 0, %s79
      %s82 = sphi 0, %s81
      %s96 = sphi 0, %s82
      %s100 = sphi 0, %s100
      %s102 = sphi 0, %s100
      %s103 = sphi 0, %s102
      %s117 = sphi 0, %s103
      %s121 = sphi 0, %s121
      %s123 = sphi 0, %s121
      %s124 = sphi 0, %s123
      %s138 = sphi 0, %s124
      %s142 = sphi 0, %s142
      %s144 = sphi 0, %s142
      %s145 = sphi 0, %s144
      %s159 = sphi 0, %s145
      %s163 = sphi 0, %s163
      %s165 = sphi 0, %s163
      %s166 = sphi 0, %s165
      %s180 = sphi 0, %s166
      %s184 = sphi 0, %s184
      %s186 = sphi 0, %s184
      %s187 = sphi 0, %s186
      %s201 = sphi 0, %s187
      %s205 = sphi 0, %s205
      %s207 = sphi 0, %s205
      %s208 = sphi 0, %s207
      %s222 = sphi 0, %s208
      %s226 = sphi 0, %s226
      %s228 = sphi 0, %s226
      %s229 = sphi 0, %s228
      %s243 = sphi 0, %s229
      %s249 = sphi 0, %s251
      %s252 = sphi 0, %s249
      %s253 = sphi 0, %s252
      %s269 = sphi 0, %s253
    $region4: #{net_comp_gcn.1} parent=1 // loop_header_branch
      %22 = sbr.rel (%p20) target = $region8
    $region5: #{net_comp_gcn.1} parent=1 // loop_body
      %s24 = ssub.s32 %s19, 1
      %s25 = ssub.s32 %s19, 2
      %s26 = sadd.s32 %s19, 1
      %s27 = ssub.s32 %s19, %s26
      %p28 = scmp.eq.s32.totalorder %s27, 0
      %s30 = sadd.s32 %s29, 1
      %s31 = scalar_select %p28, %s29, %s30
      %p34 = pneg %p28
      %p35 = scmp.eq.s32.totalorder %s19, 1
      %p36 = por %p34, %p35
      %p37 = scmp.ne.s32.totalorder %s29, %s32
      %p38 = scmp.eq.s32.totalorder %s19, 0
      %p39 = por %p37, %p38
      %p40 = scmp.ne.s32.totalorder %s29, %s32
      %p41 = scmp.eq.s32.totalorder %s24, 1
      %p42 = por %p40, %p41
      %p43 = scmp.ne.s32.totalorder %s32, %s33
      %p44 = scmp.eq.s32.totalorder %s24, 0
      %p45 = por %p43, %p44
      %p46 = scmp.ne.s32.totalorder %s32, %s33
      %p47 = scmp.eq.s32.totalorder %s25, 1
      %p48 = por %p46, %p47
      %p50 = scmp.ne.s32.totalorder %s33, %s49
      %p51 = scmp.eq.s32.totalorder %s25, 0
      %p52 = por %p50, %p51
      %s53 = ssub.s32 %s19, %s26
      %p54 = scmp.eq.s32.totalorder %s53, 0
      %s56 = sadd.s32 %s55, 1
      %s57 = scalar_select %p54, %s55, %s56
      %p60 = pneg %p54
      %p61 = scmp.eq.s32.totalorder %s19, 1
      %p62 = por %p60, %p61
      %p63 = scmp.ne.s32.totalorder %s55, %s58
      %p64 = scmp.eq.s32.totalorder %s19, 0
      %p65 = por %p63, %p64
      %p66 = scmp.ne.s32.totalorder %s55, %s58
      %p67 = scmp.eq.s32.totalorder %s24, 1
      %p68 = por %p66, %p67
      %p69 = scmp.ne.s32.totalorder %s58, %s59
      %p70 = scmp.eq.s32.totalorder %s24, 0
      %p71 = por %p69, %p70
      %p72 = scmp.ne.s32.totalorder %s58, %s59
      %p73 = scmp.eq.s32.totalorder %s25, 1
      %p74 = por %p72, %p73
      %p76 = scmp.ne.s32.totalorder %s59, %s75
      %p77 = scmp.eq.s32.totalorder %s25, 0
      %p78 = por %p76, %p77
      %s80 = sadd.s32 %s79, 1
      %p83 = scmp.eq.s32.totalorder %s19, 1
      %p84 = scmp.ne.s32.totalorder %s79, %s81
      %p85 = scmp.eq.s32.totalorder %s19, 0
      %p86 = por %p84, %p85
      %p87 = scmp.ne.s32.totalorder %s79, %s81
      %p88 = scmp.eq.s32.totalorder %s24, 1
      %p89 = por %p87, %p88
      %p90 = scmp.ne.s32.totalorder %s81, %s82
      %p91 = scmp.eq.s32.totalorder %s24, 0
      %p92 = por %p90, %p91
      %p93 = scmp.ne.s32.totalorder %s81, %s82
      %p94 = scmp.eq.s32.totalorder %s25, 1
      %p95 = por %p93, %p94
      %p97 = scmp.ne.s32.totalorder %s82, %s96
      %p98 = scmp.eq.s32.totalorder %s25, 0
      %p99 = por %p97, %p98
      %s101 = sadd.s32 %s100, 1
      %p104 = scmp.eq.s32.totalorder %s19, 1
      %p105 = scmp.ne.s32.totalorder %s100, %s102
      %p106 = scmp.eq.s32.totalorder %s19, 0
      %p107 = por %p105, %p106
      %p108 = scmp.ne.s32.totalorder %s100, %s102
      %p109 = scmp.eq.s32.totalorder %s24, 1
      %p110 = por %p108, %p109
      %p111 = scmp.ne.s32.totalorder %s102, %s103
      %p112 = scmp.eq.s32.totalorder %s24, 0
      %p113 = por %p111, %p112
      %p114 = scmp.ne.s32.totalorder %s102, %s103
      %p115 = scmp.eq.s32.totalorder %s25, 1
      %p116 = por %p114, %p115
      %p118 = scmp.ne.s32.totalorder %s103, %s117
      %p119 = scmp.eq.s32.totalorder %s25, 0
      %p120 = por %p118, %p119
      %s122 = sadd.s32 %s121, 1
      %p125 = scmp.eq.s32.totalorder %s19, 1
      %p126 = scmp.ne.s32.totalorder %s121, %s123
      %p127 = scmp.eq.s32.totalorder %s19, 0
      %p128 = por %p126, %p127
      %p129 = scmp.ne.s32.totalorder %s121, %s123
      %p130 = scmp.eq.s32.totalorder %s24, 1
      %p131 = por %p129, %p130
      %p132 = scmp.ne.s32.totalorder %s123, %s124
      %p133 = scmp.eq.s32.totalorder %s24, 0
      %p134 = por %p132, %p133
      %p135 = scmp.ne.s32.totalorder %s123, %s124
      %p136 = scmp.eq.s32.totalorder %s25, 1
      %p137 = por %p135, %p136
      %p139 = scmp.ne.s32.totalorder %s124, %s138
      %p140 = scmp.eq.s32.totalorder %s25, 0
      %p141 = por %p139, %p140
      %s143 = sadd.s32 %s142, 1
      %p146 = scmp.eq.s32.totalorder %s19, 1
      %p147 = scmp.ne.s32.totalorder %s142, %s144
      %p148 = scmp.eq.s32.totalorder %s19, 0
      %p149 = por %p147, %p148
      %p150 = scmp.ne.s32.totalorder %s142, %s144
      %p151 = scmp.eq.s32.totalorder %s24, 1
      %p152 = por %p150, %p151
      %p153 = scmp.ne.s32.totalorder %s144, %s145
      %p154 = scmp.eq.s32.totalorder %s24, 0
      %p155 = por %p153, %p154
      %p156 = scmp.ne.s32.totalorder %s144, %s145
      %p157 = scmp.eq.s32.totalorder %s25, 1
      %p158 = por %p156, %p157
      %p160 = scmp.ne.s32.totalorder %s145, %s159
      %p161 = scmp.eq.s32.totalorder %s25, 0
      %p162 = por %p160, %p161
      %s164 = sadd.s32 %s163, 1
      %p167 = scmp.eq.s32.totalorder %s19, 1
      %p168 = scmp.ne.s32.totalorder %s163, %s165
      %p169 = scmp.eq.s32.totalorder %s19, 0
      %p170 = por %p168, %p169
      %p171 = scmp.ne.s32.totalorder %s163, %s165
      %p172 = scmp.eq.s32.totalorder %s24, 1
      %p173 = por %p171, %p172
      %p174 = scmp.ne.s32.totalorder %s165, %s166
      %p175 = scmp.eq.s32.totalorder %s24, 0
      %p176 = por %p174, %p175
      %p177 = scmp.ne.s32.totalorder %s165, %s166
      %p178 = scmp.eq.s32.totalorder %s25, 1
      %p179 = por %p177, %p178
      %p181 = scmp.ne.s32.totalorder %s166, %s180
      %p182 = scmp.eq.s32.totalorder %s25, 0
      %p183 = por %p181, %p182
      %s185 = sadd.s32 %s184, 1
      %p188 = scmp.eq.s32.totalorder %s19, 1
      %p189 = scmp.ne.s32.totalorder %s184, %s186
      %p190 = scmp.eq.s32.totalorder %s19, 0
      %p191 = por %p189, %p190
      %p192 = scmp.ne.s32.totalorder %s184, %s186
      %p193 = scmp.eq.s32.totalorder %s24, 1
      %p194 = por %p192, %p193
      %p195 = scmp.ne.s32.totalorder %s186, %s187
      %p196 = scmp.eq.s32.totalorder %s24, 0
      %p197 = por %p195, %p196
      %p198 = scmp.ne.s32.totalorder %s186, %s187
      %p199 = scmp.eq.s32.totalorder %s25, 1
      %p200 = por %p198, %p199
      %p202 = scmp.ne.s32.totalorder %s187, %s201
      %p203 = scmp.eq.s32.totalorder %s25, 0
      %p204 = por %p202, %p203
      %s206 = sadd.s32 %s205, 1
      %p209 = scmp.eq.s32.totalorder %s19, 1
      %p210 = scmp.ne.s32.totalorder %s205, %s207
      %p211 = scmp.eq.s32.totalorder %s19, 0
      %p212 = por %p210, %p211
      %p213 = scmp.ne.s32.totalorder %s205, %s207
      %p214 = scmp.eq.s32.totalorder %s24, 1
      %p215 = por %p213, %p214
      %p216 = scmp.ne.s32.totalorder %s207, %s208
      %p217 = scmp.eq.s32.totalorder %s24, 0
      %p218 = por %p216, %p217
      %p219 = scmp.ne.s32.totalorder %s207, %s208
      %p220 = scmp.eq.s32.totalorder %s25, 1
      %p221 = por %p219, %p220
      %p223 = scmp.ne.s32.totalorder %s208, %s222
      %p224 = scmp.eq.s32.totalorder %s25, 0
      %p225 = por %p223, %p224
      %s227 = sadd.s32 %s226, 1
      %p230 = scmp.eq.s32.totalorder %s19, 1
      %p231 = scmp.ne.s32.totalorder %s226, %s228
      %p232 = scmp.eq.s32.totalorder %s19, 0
      %p233 = por %p231, %p232
      %p234 = scmp.ne.s32.totalorder %s226, %s228
      %p235 = scmp.eq.s32.totalorder %s24, 1
      %p236 = por %p234, %p235
      %p237 = scmp.ne.s32.totalorder %s228, %s229
      %p238 = scmp.eq.s32.totalorder %s24, 0
      %p239 = por %p237, %p238
      %p240 = scmp.ne.s32.totalorder %s228, %s229
      %p241 = scmp.eq.s32.totalorder %s25, 1
      %p242 = por %p240, %p241
      %p244 = scmp.ne.s32.totalorder %s229, %s243
      %p245 = scmp.eq.s32.totalorder %s25, 0
      %p246 = por %p244, %p245
      %s247 = ssub.s32 %s19, %s26
      %p248 = scmp.eq.s32.totalorder %s247, 0
      %s250 = sadd.s32 %s249, 1
      %s251 = scalar_select %p248, %s249, %s250
      %p254 = pneg %p248
      %p255 = scmp.eq.s32.totalorder %s19, 1
      %p256 = por %p254, %p255
      %p257 = scmp.ne.s32.totalorder %s249, %s252
      %p258 = scmp.eq.s32.totalorder %s19, 0
      %p259 = por %p257, %p258
      %p260 = scmp.ne.s32.totalorder %s249, %s252
      %p261 = scmp.eq.s32.totalorder %s24, 1
      %p262 = por %p260, %p261
      %p263 = scmp.ne.s32.totalorder %s252, %s253
      %p264 = scmp.eq.s32.totalorder %s24, 0
      %p265 = por %p263, %p264
      %p266 = scmp.ne.s32.totalorder %s252, %s253
      %p267 = scmp.eq.s32.totalorder %s25, 1
      %p268 = por %p266, %p267
      %p270 = scmp.ne.s32.totalorder %s253, %s269
      %p271 = scmp.eq.s32.totalorder %s25, 0
      %p272 = por %p270, %p271
      %p273 = scmp.le.s32.totalorder 1, %s19
      %p274 = scmp.lt.s32.totalorder %s19, 3
      %p275 = pnand %p273, %p274
      %p276 = pneg %p275
      // Predicated region
      $region9: #{net_comp_gcn.1} parent=5 // pred_check
        _
      $region10: #{net_comp_gcn.1} parent=5 // pred_check_branch
        %278 = sbr.rel (%p275) target = $region12
      $region11: #{net_comp_gcn.1} parent=5 // pred_region
        %s279 = ssub.s32 %s19, 1
        // Predicated region
        $region13: #{net_comp_gcn.1} parent=11 // pred_check
          %p280 = pneg %p92
        $region14: #{net_comp_gcn.1} parent=11 // pred_check_branch
          %282 = sbr.rel (%p280) target = $region16
        $region15: #{net_comp_gcn.1} parent=11 // pred_region
          _
        $region16: #{net_comp_gcn.1} parent=11 // pred_fallthru
          _
        // Predicated region
        $region17: #{net_comp_gcn.1} parent=11 // pred_check
          %p283 = pneg %p113
        $region18: #{net_comp_gcn.1} parent=11 // pred_check_branch
          %285 = sbr.rel (%p283) target = $region20
        $region19: #{net_comp_gcn.1} parent=11 // pred_region
          _
        $region20: #{net_comp_gcn.1} parent=11 // pred_fallthru
          _
        // Predicated region
        $region21: #{net_comp_gcn.1} parent=11 // pred_check
          %p286 = pneg %p134
        $region22: #{net_comp_gcn.1} parent=11 // pred_check_branch
          %288 = sbr.rel (%p286) target = $region24
        $region23: #{net_comp_gcn.1} parent=11 // pred_region
          _
        $region24: #{net_comp_gcn.1} parent=11 // pred_fallthru
          _
        // Predicated region
        $region25: #{net_comp_gcn.1} parent=11 // pred_check
          %p289 = pneg %p155
        $region26: #{net_comp_gcn.1} parent=11 // pred_check_branch
          %291 = sbr.rel (%p289) target = $region28
        $region27: #{net_comp_gcn.1} parent=11 // pred_region
          _
        $region28: #{net_comp_gcn.1} parent=11 // pred_fallthru
          _
        // Predicated region
        $region29: #{net_comp_gcn.1} parent=11 // pred_check
          %p292 = pneg %p176
        $region30: #{net_comp_gcn.1} parent=11 // pred_check_branch
          %294 = sbr.rel (%p292) target = $region32
        $region31: #{net_comp_gcn.1} parent=11 // pred_region
          _
        $region32: #{net_comp_gcn.1} parent=11 // pred_fallthru
          _
        // Predicated region
        $region33: #{net_comp_gcn.1} parent=11 // pred_check
          %p295 = pneg %p197
        $region34: #{net_comp_gcn.1} parent=11 // pred_check_branch
          %297 = sbr.rel (%p295) target = $region36
        $region35: #{net_comp_gcn.1} parent=11 // pred_region
          _
        $region36: #{net_comp_gcn.1} parent=11 // pred_fallthru
          _
        // Predicated region
        $region37: #{net_comp_gcn.1} parent=11 // pred_check
          %p298 = pneg %p218
        $region38: #{net_comp_gcn.1} parent=11 // pred_check_branch
          %300 = sbr.rel (%p298) target = $region40
        $region39: #{net_comp_gcn.1} parent=11 // pred_region
          _
        $region40: #{net_comp_gcn.1} parent=11 // pred_fallthru
          _
        // Predicated region
        $region41: #{net_comp_gcn.1} parent=11 // pred_check
          %p301 = pneg %p239
        $region42: #{net_comp_gcn.1} parent=11 // pred_check_branch
          %303 = sbr.rel (%p301) target = $region44
        $region43: #{net_comp_gcn.1} parent=11 // pred_region
          _
        $region44: #{net_comp_gcn.1} parent=11 // pred_fallthru
          _
      $region12: #{net_comp_gcn.1} parent=5 // pred_fallthru
        _
      %p304 = scmp.lt.s32.totalorder %s19, 2
      // Predicated region
      $region45: #{net_comp_gcn.1} parent=5 // pred_check
        %p305 = pneg %p304
      $region46: #{net_comp_gcn.1} parent=5 // pred_check_branch
        %307 = sbr.rel (%p305) target = $region48
      $region47: #{net_comp_gcn.1} parent=5 // pred_region
        // Predicated region
        $region49: #{net_comp_gcn.1} parent=47 // pred_check
          %p308 = pneg %p39
        $region50: #{net_comp_gcn.1} parent=47 // pred_check_branch
          %310 = sbr.rel (%p308) target = $region52
        $region51: #{net_comp_gcn.1} parent=47 // pred_region
          %p311 = scmp.lt.s32.totalorder %s19, 1
          %s312 = scalar_select %p311, %s19, 1
          %s313 = smul.addr %s312, 16
          %s314 = smul.addr %s313, 4
          %s315 = scalar_lea.vmem %s0, %s314
        $region52: #{net_comp_gcn.1} parent=47 // pred_fallthru
          _
        // Predicated region
        $region53: #{net_comp_gcn.1} parent=47 // pred_check
          %p316 = pneg %p65
        $region54: #{net_comp_gcn.1} parent=47 // pred_check_branch
          %318 = sbr.rel (%p316) target = $region56
        $region55: #{net_comp_gcn.1} parent=47 // pred_region
          %p319 = scmp.lt.s32.totalorder %s19, 1
          %s320 = scalar_select %p319, %s19, 1
          %s321 = smul.addr %s320, 16
          %s322 = smul.addr %s321, 8
          %s323 = scalar_lea.vmem %s1, %s322
        $region56: #{net_comp_gcn.1} parent=47 // pred_fallthru
          _
      $region48: #{net_comp_gcn.1} parent=5 // pred_fallthru
        _
      %p324 = scmp.le.s32.totalorder 1, %s19
      %p325 = scmp.lt.s32.totalorder %s19, 3
      %p326 = pnand %p324, %p325
      %p327 = pneg %p326
      // Predicated region
      $region57: #{net_comp_gcn.1} parent=5 // pred_check
        _
      $region58: #{net_comp_gcn.1} parent=5 // pred_check_branch
        %329 = sbr.rel (%p326) target = $region60
      $region59: #{net_comp_gcn.1} parent=5 // pred_region
        %s330 = ssub.s32 %s19, 1
        %p331 = scmp.lt.s32.totalorder %s24, 1
        %s332 = scalar_select %p331, %s24, 1
        %s333 = smul.addr %s332, 16
        %s334 = smul.addr %s333, 4
        %s335 = scalar_lea.vmem %s0, %s334
        %p336 = pneg %p45
        %p337 = pneg %p42
        %p338 = scmp.lt.s32.totalorder %s24, 1
        %s339 = scalar_select %p338, %s24, 1
        %s340 = smul.addr %s339, 16
        %s341 = smul.addr %s340, 8
        %s342 = scalar_lea.vmem %s1, %s341
        %p343 = pneg %p71
        %p344 = pneg %p68
        %p345 = pneg %p92
        %p346 = pneg %p89
        %p347 = pneg %p113
        %p348 = pneg %p110
        %p349 = pneg %p134
        %p350 = pneg %p131
        %p351 = pneg %p155
        %p352 = pneg %p152
        %p353 = pneg %p176
        %p354 = pneg %p173
        %p355 = pneg %p197
        %p356 = pneg %p194
        %p357 = pneg %p218
        %p358 = pneg %p215
        %p359 = pneg %p239
        %p360 = pneg %p236
        %p361 = pneg %p265
        %p362 = pneg %p262
        %s363 = sand.u32 %s252, 1
        %s364 = scalar_lea.sflag [#allocation3], %s363
        %s365 = sand.u32 %s252, 1
        %s366 = smul.addr %s365, 256
        %s367 = scalar_lea.vmem [#allocation2], %s366
        %p368 = scmp.lt.s32.totalorder %s24, 1
        %s369 = scalar_select %p368, %s24, 1
        %s370 = smul.addr %s369, 16
        %s371 = smul.addr %s370, 4
        %s372 = scalar_lea.vmem %s0, %s371
        %p373 = scmp.lt.s32.totalorder %s24, 1
        %s374 = scalar_select %p373, %s24, 1
        %s375 = smul.addr %s374, 16
        %s376 = smul.addr %s375, 8
        %s377 = scalar_lea.vmem %s1, %s376
        %v379 = vld [vmem:[%s372] sm:$0xf]
        %v380 = vld [vmem:[%s372 + $0x4] sm:$0xf]
        %v381 = vld [vmem:[%s372 + $0x8] sm:$0xf]
        %v382 = vld [vmem:[%s372 + $0xc] sm:$0xf]
        %v383 = vld [vmem:[%s372 + $0x10] sm:$0xf]
        %v384 = vld [vmem:[%s372 + $0x14] sm:$0xf]
        %v385 = vld [vmem:[%s372 + $0x18] sm:$0xf]
        %v386 = vld [vmem:[%s372 + $0x1c] sm:$0xf]
        %v387 = vld [vmem:[%s372 + $0x20] sm:$0xf]
        %v388 = vld [vmem:[%s372 + $0x24] sm:$0xf]
        %v389 = vld [vmem:[%s372 + $0x28] sm:$0xf]
        %v390 = vld [vmem:[%s372 + $0x2c] sm:$0xf]
        %v391 = vld [vmem:[%s372 + $0x30] sm:$0xf]
        %v392 = vld [vmem:[%s372 + $0x34] sm:$0xf]
        %v393 = vld [vmem:[%s372 + $0x38] sm:$0xf]
        %v394 = vld [vmem:[%s372 + $0x3c] sm:$0xf]
        %v395 = vld [vmem:[%s377] sm:$0xff]
        %v396 = vld [vmem:[%s377 + $0x8] sm:$0xff]
        %v397 = vld [vmem:[%s377 + $0x10] sm:$0xff]
        %v398 = vld [vmem:[%s377 + $0x18] sm:$0xff]
        %v399 = vld [vmem:[%s377 + $0x20] sm:$0xff]
        %v400 = vld [vmem:[%s377 + $0x28] sm:$0xff]
        %v401 = vld [vmem:[%s377 + $0x30] sm:$0xff]
        %v402 = vld [vmem:[%s377 + $0x38] sm:$0xff]
        %v403 = vld [vmem:[%s377 + $0x40] sm:$0xff]
        %v404 = vld [vmem:[%s377 + $0x48] sm:$0xff]
        %v405 = vld [vmem:[%s377 + $0x50] sm:$0xff]
        %v406 = vld [vmem:[%s377 + $0x58] sm:$0xff]
        %v407 = vld [vmem:[%s377 + $0x60] sm:$0xff]
        %v408 = vld [vmem:[%s377 + $0x68] sm:$0xff]
        %v409 = vld [vmem:[%s377 + $0x70] sm:$0xff]
        %v410 = vld [vmem:[%s377 + $0x78] sm:$0xff]
        %v411 = vpack.c.bf16 %v396, %v395
        %v412 = vpack.c.bf16 %v398, %v397
        %v413 = vpack.c.bf16 %v400, %v399
        %v414 = vpack.c.bf16 %v402, %v401
        %v415 = vpack.c.bf16 %v404, %v403
        %v416 = vpack.c.bf16 %v406, %v405
        %v417 = vpack.c.bf16 %v408, %v407
        %v418 = vpack.c.bf16 %v410, %v409
        %v419 = vld [vmem:[%s2] sm:$0xff]
        %v420 = vld [vmem:[%s2 + $0x8] sm:$0xff]
        %v421 = vld [vmem:[%s2 + $0x10] sm:$0xff]
        %v422 = vld [vmem:[%s2 + $0x18] sm:$0xff]
        %v423 = vld [vmem:[%s2 + $0x20] sm:$0xff]
        %v424 = vld [vmem:[%s2 + $0x28] sm:$0xff]
        %v425 = vld [vmem:[%s2 + $0x30] sm:$0xff]
        %v426 = vld [vmem:[%s2 + $0x38] sm:$0xff]
        %v427 = vld [vmem:[%s2 + $0x40] sm:$0xff]
        %v428 = vld [vmem:[%s2 + $0x48] sm:$0xff]
        %v429 = vld [vmem:[%s2 + $0x50] sm:$0xff]
        %v430 = vld [vmem:[%s2 + $0x58] sm:$0xff]
        %v431 = vld [vmem:[%s2 + $0x60] sm:$0xff]
        %v432 = vld [vmem:[%s2 + $0x68] sm:$0xff]
        %v433 = vld [vmem:[%s2 + $0x70] sm:$0xff]
        %v434 = vld [vmem:[%s2 + $0x78] sm:$0xff]
        %v435 = vld [vmem:[%s3] sm:$0x3]
        %v437 = vlaneseq
        %v438 = vshrl.u32 %v437, 7
        %v439 = vsub.s32 0, %v438
        %v440 = vrot.slane %v435, %v439
        %v441 = vlaneseq
        %v442 = vshrl.u32 %v441, 7
        %v443 = vsub.s32 1, %v442
        %v444 = vrot.slane %v435, %v443
        %v463 = vunpack.c.l.b16 %v379
        %v464 = vunpack.c.l.b16 %v380
        %v465 = vunpack.c.l.b16 %v381
        %v466 = vunpack.c.l.b16 %v382
        %v467 = vunpack.c.l.b16 %v383
        %v468 = vunpack.c.l.b16 %v384
        %v469 = vunpack.c.l.b16 %v385
        %v470 = vunpack.c.l.b16 %v386
        %v471 = vunpack.c.l.b16 %v387
        %v472 = vunpack.c.l.b16 %v388
        %v473 = vunpack.c.l.b16 %v389
        %v474 = vunpack.c.l.b16 %v390
        %v475 = vunpack.c.l.b16 %v391
        %v476 = vunpack.c.l.b16 %v392
        %v477 = vunpack.c.l.b16 %v393
        %v478 = vunpack.c.l.b16 %v394
        %v479 = vpack.c.b16 %v464, %v463
        %v480 = vpack.c.b16 %v466, %v465
        %v481 = vpack.c.b16 %v468, %v467
        %v482 = vpack.c.b16 %v470, %v469
        %v483 = vpack.c.b16 %v472, %v471
        %v484 = vpack.c.b16 %v474, %v473
        %v485 = vpack.c.b16 %v476, %v475
        %v486 = vpack.c.b16 %v478, %v477
        %v511 = vunpack.c.l.b16 %v419
        %v512 = vunpack.c.h.b16 %v419
        %v513 = vunpack.c.l.b16 %v420
        %v514 = vunpack.c.h.b16 %v420
        %v515 = vunpack.c.l.b16 %v421
        %v516 = vunpack.c.h.b16 %v421
        %v517 = vunpack.c.l.b16 %v422
        %v518 = vunpack.c.h.b16 %v422
        %v519 = vunpack.c.l.b16 %v423
        %v520 = vunpack.c.h.b16 %v423
        %v521 = vunpack.c.l.b16 %v424
        %v522 = vunpack.c.h.b16 %v424
        %v523 = vunpack.c.l.b16 %v425
        %v524 = vunpack.c.h.b16 %v425
        %v525 = vunpack.c.l.b16 %v426
        %v526 = vunpack.c.h.b16 %v426
        %v527 = vunpack.c.l.b16 %v427
        %v528 = vunpack.c.h.b16 %v427
        %v529 = vunpack.c.l.b16 %v428
        %v530 = vunpack.c.h.b16 %v428
        %v531 = vunpack.c.l.b16 %v429
        %v532 = vunpack.c.h.b16 %v429
        %v533 = vunpack.c.l.b16 %v430
        %v534 = vunpack.c.h.b16 %v430
        %v535 = vunpack.c.l.b16 %v431
        %v536 = vunpack.c.h.b16 %v431
        %v537 = vunpack.c.l.b16 %v432
        %v538 = vunpack.c.h.b16 %v432
        %v539 = vunpack.c.l.b16 %v433
        %v540 = vunpack.c.h.b16 %v433
        %v541 = vunpack.c.l.b16 %v434
        %v542 = vunpack.c.h.b16 %v434
        %v543 = vpack.c.b16 %v513, %v511
        %v544 = vpack.c.b16 %v514, %v512
        %v545 = vpack.c.b16 %v517, %v515
        %v546 = vpack.c.b16 %v518, %v516
        %v547 = vpack.c.b16 %v521, %v519
        %v548 = vpack.c.b16 %v522, %v520
        %v549 = vpack.c.b16 %v525, %v523
        %v550 = vpack.c.b16 %v526, %v524
        %v551 = vpack.c.b16 %v529, %v527
        %v552 = vpack.c.b16 %v530, %v528
        %v553 = vpack.c.b16 %v533, %v531
        %v554 = vpack.c.b16 %v534, %v532
        %v555 = vpack.c.b16 %v537, %v535
        %v556 = vpack.c.b16 %v538, %v536
        %v557 = vpack.c.b16 %v541, %v539
        %v558 = vpack.c.b16 %v542, %v540
        %575 = vmatprep.subr.bf16.mxu0 %v558
        %576 = vmatpush1.bf16.msra.mxu0 %v557
        %577 = vmatprep.subr.bf16.mxu0 %v556
        %578 = vmatpush1.bf16.msra.mxu0 %v555
        %579 = vmatprep.subr.bf16.mxu0 %v554
        %580 = vmatpush1.bf16.msra.mxu0 %v553
        %581 = vmatprep.subr.bf16.mxu0 %v552
        %582 = vmatpush1.bf16.msra.mxu0 %v551
        %583 = vmatprep.subr.bf16.mxu0 %v550
        %584 = vmatpush1.bf16.msra.mxu0 %v549
        %585 = vmatprep.subr.bf16.mxu0 %v548
        %586 = vmatpush1.bf16.msra.mxu0 %v547
        %587 = vmatprep.subr.bf16.mxu0 %v546
        %588 = vmatpush1.bf16.msra.mxu0 %v545
        %589 = vmatprep.subr.bf16.mxu0 %v544
        %590 = vmatpush1.bf16.msra.mxu0 %v543
        %591 = vmatprep.subr.bf16.mxu0 0
        %592 = vmatpush2.bf16.msra.mxu0 0
        %593 = vmatprep.subr.bf16.mxu0 0
        %594 = vmatpush2.bf16.msra.mxu0 0
        %595 = vmatprep.subr.bf16.mxu0 0
        %596 = vmatpush2.bf16.msra.mxu0 0
        %597 = vmatprep.subr.bf16.mxu0 0
        %598 = vmatpush2.bf16.msra.mxu0 0
        %599 = vmatprep.subr.bf16.mxu0 0
        %600 = vmatpush2.bf16.msra.mxu0 0
        %601 = vmatprep.subr.bf16.mxu0 0
        %602 = vmatpush2.bf16.msra.mxu0 0
        %603 = vmatprep.subr.bf16.mxu0 0
        %604 = vmatpush2.bf16.msra.mxu0 0
        %605 = vmatprep.subr.bf16.mxu0 0
        %606 = vmatpush2.bf16.msra.mxu0 0
        %607 = vmatprep.mubr.bf16.mxu0 0
        %608 = vmatmul.mubr.bf16.gmra.mxu0 %v479
        %v609 = vpop.f32.mrf.mxu0
        %v610 = vadd.f32 %v440, %v609
        %v611 = vpop.f32.mrf.mxu0
        %v612 = vadd.f32 %v444, %v611
        %v613 = vpop.f32.mrf.mxu0
        %v614 = vadd.f32 %v440, %v613
        %v615 = vpop.f32.mrf.mxu0
        %v616 = vadd.f32 %v444, %v615
        %617 = vmatprep.mubr.bf16.mxu0 0
        %618 = vmatmul.mubr.bf16.gmra.mxu0 %v480
        %v619 = vpop.f32.mrf.mxu0
        %v620 = vadd.f32 %v440, %v619
        %v621 = vpop.f32.mrf.mxu0
        %v622 = vadd.f32 %v444, %v621
        %v623 = vpop.f32.mrf.mxu0
        %v624 = vadd.f32 %v440, %v623
        %v625 = vpop.f32.mrf.mxu0
        %v626 = vadd.f32 %v444, %v625
        %627 = vmatprep.mubr.bf16.mxu0 0
        %628 = vmatmul.mubr.bf16.gmra.mxu0 %v481
        %v629 = vpop.f32.mrf.mxu0
        %v630 = vadd.f32 %v440, %v629
        %v631 = vpop.f32.mrf.mxu0
        %v632 = vadd.f32 %v444, %v631
        %v633 = vpop.f32.mrf.mxu0
        %v634 = vadd.f32 %v440, %v633
        %v635 = vpop.f32.mrf.mxu0
        %v636 = vadd.f32 %v444, %v635
        %637 = vmatprep.mubr.bf16.mxu0 0
        %638 = vmatmul.mubr.bf16.gmra.mxu0 %v482
        %v639 = vpop.f32.mrf.mxu0
        %v640 = vadd.f32 %v440, %v639
        %v641 = vpop.f32.mrf.mxu0
        %v642 = vadd.f32 %v444, %v641
        %v643 = vpop.f32.mrf.mxu0
        %v644 = vadd.f32 %v440, %v643
        %v645 = vpop.f32.mrf.mxu0
        %v646 = vadd.f32 %v444, %v645
        %647 = vmatprep.mubr.bf16.mxu0 0
        %648 = vmatmul.mubr.bf16.gmra.mxu0 %v483
        %v649 = vpop.f32.mrf.mxu0
        %v650 = vadd.f32 %v440, %v649
        %v651 = vpop.f32.mrf.mxu0
        %v652 = vadd.f32 %v444, %v651
        %v653 = vpop.f32.mrf.mxu0
        %v654 = vadd.f32 %v440, %v653
        %v655 = vpop.f32.mrf.mxu0
        %v656 = vadd.f32 %v444, %v655
        %657 = vmatprep.mubr.bf16.mxu0 0
        %658 = vmatmul.mubr.bf16.gmra.mxu0 %v484
        %v659 = vpop.f32.mrf.mxu0
        %v660 = vadd.f32 %v440, %v659
        %v661 = vpop.f32.mrf.mxu0
        %v662 = vadd.f32 %v444, %v661
        %v663 = vpop.f32.mrf.mxu0
        %v664 = vadd.f32 %v440, %v663
        %v665 = vpop.f32.mrf.mxu0
        %v666 = vadd.f32 %v444, %v665
        %667 = vmatprep.mubr.bf16.mxu0 0
        %668 = vmatmul.mubr.bf16.gmra.mxu0 %v485
        %v669 = vpop.f32.mrf.mxu0
        %v670 = vadd.f32 %v440, %v669
        %v671 = vpop.f32.mrf.mxu0
        %v672 = vadd.f32 %v444, %v671
        %v673 = vpop.f32.mrf.mxu0
        %v674 = vadd.f32 %v440, %v673
        %v675 = vpop.f32.mrf.mxu0
        %v676 = vadd.f32 %v444, %v675
        %677 = vmatprep.mubr.bf16.mxu0 0
        %678 = vmatmul.mubr.bf16.gmra.mxu0 %v486
        %v679 = vpop.f32.mrf.mxu0
        %v680 = vadd.f32 %v440, %v679
        %v681 = vpop.f32.mrf.mxu0
        %v682 = vadd.f32 %v444, %v681
        %v683 = vpop.f32.mrf.mxu0
        %v684 = vadd.f32 %v440, %v683
        %v685 = vpop.f32.mrf.mxu0
        %v686 = vadd.f32 %v444, %v685
        %687 = vdwg.mxu0
        %v688 = vpack.c.bf16 %v614, %v610
        %v689 = vpack.c.bf16 %v616, %v612
        %v690 = vpack.c.bf16 %v624, %v620
        %v691 = vpack.c.bf16 %v626, %v622
        %v692 = vpack.c.bf16 %v634, %v630
        %v693 = vpack.c.bf16 %v636, %v632
        %v694 = vpack.c.bf16 %v644, %v640
        %v695 = vpack.c.bf16 %v646, %v642
        %v696 = vpack.c.bf16 %v654, %v650
        %v697 = vpack.c.bf16 %v656, %v652
        %v698 = vpack.c.bf16 %v664, %v660
        %v699 = vpack.c.bf16 %v666, %v662
        %v700 = vpack.c.bf16 %v674, %v670
        %v701 = vpack.c.bf16 %v676, %v672
        %v702 = vpack.c.bf16 %v684, %v680
        %v703 = vpack.c.bf16 %v686, %v682
        %704 = vmatprep.subr.bf16.mxu0 %v703
        %705 = vmatpush1.bf16.msra.mxu0 %v702
        %706 = vmatprep.subr.bf16.mxu0 %v701
        %707 = vmatpush1.bf16.msra.mxu0 %v700
        %708 = vmatprep.subr.bf16.mxu0 %v699
        %709 = vmatpush1.bf16.msra.mxu0 %v698
        %710 = vmatprep.subr.bf16.mxu0 %v697
        %711 = vmatpush1.bf16.msra.mxu0 %v696
        %712 = vmatprep.subr.bf16.mxu0 %v695
        %713 = vmatpush1.bf16.msra.mxu0 %v694
        %714 = vmatprep.subr.bf16.mxu0 %v693
        %715 = vmatpush1.bf16.msra.mxu0 %v692
        %716 = vmatprep.subr.bf16.mxu0 %v691
        %717 = vmatpush1.bf16.msra.mxu0 %v690
        %718 = vmatprep.subr.bf16.mxu0 %v689
        %719 = vmatpush1.bf16.msra.mxu0 %v688
        %720 = vmatprep.subr.bf16.mxu0 0
        %721 = vmatpush2.bf16.msra.mxu0 0
        %722 = vmatprep.subr.bf16.mxu0 0
        %723 = vmatpush2.bf16.msra.mxu0 0
        %724 = vmatprep.subr.bf16.mxu0 0
        %725 = vmatpush2.bf16.msra.mxu0 0
        %726 = vmatprep.subr.bf16.mxu0 0
        %727 = vmatpush2.bf16.msra.mxu0 0
        %728 = vmatprep.subr.bf16.mxu0 0
        %729 = vmatpush2.bf16.msra.mxu0 0
        %730 = vmatprep.subr.bf16.mxu0 0
        %731 = vmatpush2.bf16.msra.mxu0 0
        %732 = vmatprep.subr.bf16.mxu0 0
        %733 = vmatpush2.bf16.msra.mxu0 0
        %734 = vmatprep.subr.bf16.mxu0 0
        %735 = vmatpush2.bf16.msra.mxu0 0
        %736 = vmatprep.mubr.bf16.mxu0 0
        %737 = vmatmul.mubr.bf16.gmra.mxu0 %v411
        %v738 = vpop.f32.mrf.mxu0
        %v739 = vadd.f32 0.0, %v738
        %v740 = vpop.f32.mrf.mxu0
        %v741 = vadd.f32 0.0, %v740
        %v742 = vpop.f32.mrf.mxu0
        %v743 = vadd.f32 0.0, %v742
        %v744 = vpop.f32.mrf.mxu0
        %v745 = vadd.f32 0.0, %v744
        %746 = vmatprep.mubr.bf16.mxu0 0
        %747 = vmatmul.mubr.bf16.gmra.mxu0 %v412
        %v748 = vpop.f32.mrf.mxu0
        %v749 = vadd.f32 0.0, %v748
        %v750 = vpop.f32.mrf.mxu0
        %v751 = vadd.f32 0.0, %v750
        %v752 = vpop.f32.mrf.mxu0
        %v753 = vadd.f32 0.0, %v752
        %v754 = vpop.f32.mrf.mxu0
        %v755 = vadd.f32 0.0, %v754
        %756 = vmatprep.mubr.bf16.mxu0 0
        %757 = vmatmul.mubr.bf16.gmra.mxu0 %v413
        %v758 = vpop.f32.mrf.mxu0
        %v759 = vadd.f32 0.0, %v758
        %v760 = vpop.f32.mrf.mxu0
        %v761 = vadd.f32 0.0, %v760
        %v762 = vpop.f32.mrf.mxu0
        %v763 = vadd.f32 0.0, %v762
        %v764 = vpop.f32.mrf.mxu0
        %v765 = vadd.f32 0.0, %v764
        %766 = vmatprep.mubr.bf16.mxu0 0
        %767 = vmatmul.mubr.bf16.gmra.mxu0 %v414
        %v768 = vpop.f32.mrf.mxu0
        %v769 = vadd.f32 0.0, %v768
        %v770 = vpop.f32.mrf.mxu0
        %v771 = vadd.f32 0.0, %v770
        %v772 = vpop.f32.mrf.mxu0
        %v773 = vadd.f32 0.0, %v772
        %v774 = vpop.f32.mrf.mxu0
        %v775 = vadd.f32 0.0, %v774
        %776 = vmatprep.mubr.bf16.mxu0 0
        %777 = vmatmul.mubr.bf16.gmra.mxu0 %v415
        %v778 = vpop.f32.mrf.mxu0
        %v779 = vadd.f32 0.0, %v778
        %v780 = vpop.f32.mrf.mxu0
        %v781 = vadd.f32 0.0, %v780
        %v782 = vpop.f32.mrf.mxu0
        %v783 = vadd.f32 0.0, %v782
        %v784 = vpop.f32.mrf.mxu0
        %v785 = vadd.f32 0.0, %v784
        %786 = vmatprep.mubr.bf16.mxu0 0
        %787 = vmatmul.mubr.bf16.gmra.mxu0 %v416
        %v788 = vpop.f32.mrf.mxu0
        %v789 = vadd.f32 0.0, %v788
        %v790 = vpop.f32.mrf.mxu0
        %v791 = vadd.f32 0.0, %v790
        %v792 = vpop.f32.mrf.mxu0
        %v793 = vadd.f32 0.0, %v792
        %v794 = vpop.f32.mrf.mxu0
        %v795 = vadd.f32 0.0, %v794
        %796 = vmatprep.mubr.bf16.mxu0 0
        %797 = vmatmul.mubr.bf16.gmra.mxu0 %v417
        %v798 = vpop.f32.mrf.mxu0
        %v799 = vadd.f32 0.0, %v798
        %v800 = vpop.f32.mrf.mxu0
        %v801 = vadd.f32 0.0, %v800
        %v802 = vpop.f32.mrf.mxu0
        %v803 = vadd.f32 0.0, %v802
        %v804 = vpop.f32.mrf.mxu0
        %v805 = vadd.f32 0.0, %v804
        %806 = vmatprep.mubr.bf16.mxu0 0
        %807 = vmatmul.mubr.bf16.gmra.mxu0 %v418
        %v808 = vpop.f32.mrf.mxu0
        %v809 = vadd.f32 0.0, %v808
        %v810 = vpop.f32.mrf.mxu0
        %v811 = vadd.f32 0.0, %v810
        %v812 = vpop.f32.mrf.mxu0
        %v813 = vadd.f32 0.0, %v812
        %v814 = vpop.f32.mrf.mxu0
        %v815 = vadd.f32 0.0, %v814
        %816 = vdwg.mxu0
        %v817 = vmax.f32 %v739, 0.0
        %v818 = vmax.f32 %v741, 0.0
        %v819 = vmax.f32 %v743, 0.0
        %v820 = vmax.f32 %v745, 0.0
        %v821 = vmax.f32 %v749, 0.0
        %v822 = vmax.f32 %v751, 0.0
        %v823 = vmax.f32 %v753, 0.0
        %v824 = vmax.f32 %v755, 0.0
        %v825 = vmax.f32 %v759, 0.0
        %v826 = vmax.f32 %v761, 0.0
        %v827 = vmax.f32 %v763, 0.0
        %v828 = vmax.f32 %v765, 0.0
        %v829 = vmax.f32 %v769, 0.0
        %v830 = vmax.f32 %v771, 0.0
        %v831 = vmax.f32 %v773, 0.0
        %v832 = vmax.f32 %v775, 0.0
        %v833 = vmax.f32 %v779, 0.0
        %v834 = vmax.f32 %v781, 0.0
        %v835 = vmax.f32 %v783, 0.0
        %v836 = vmax.f32 %v785, 0.0
        %v837 = vmax.f32 %v789, 0.0
        %v838 = vmax.f32 %v791, 0.0
        %v839 = vmax.f32 %v793, 0.0
        %v840 = vmax.f32 %v795, 0.0
        %v841 = vmax.f32 %v799, 0.0
        %v842 = vmax.f32 %v801, 0.0
        %v843 = vmax.f32 %v803, 0.0
        %v844 = vmax.f32 %v805, 0.0
        %v845 = vmax.f32 %v809, 0.0
        %v846 = vmax.f32 %v811, 0.0
        %v847 = vmax.f32 %v813, 0.0
        %v848 = vmax.f32 %v815, 0.0
        %v849 = vpack.c.bf16 %v819, %v817
        %v850 = vpack.c.bf16 %v820, %v818
        %v851 = vpack.c.bf16 %v823, %v821
        %v852 = vpack.c.bf16 %v824, %v822
        %v853 = vpack.c.bf16 %v827, %v825
        %v854 = vpack.c.bf16 %v828, %v826
        %v855 = vpack.c.bf16 %v831, %v829
        %v856 = vpack.c.bf16 %v832, %v830
        %v857 = vpack.c.bf16 %v835, %v833
        %v858 = vpack.c.bf16 %v836, %v834
        %v859 = vpack.c.bf16 %v839, %v837
        %v860 = vpack.c.bf16 %v840, %v838
        %v861 = vpack.c.bf16 %v843, %v841
        %v862 = vpack.c.bf16 %v844, %v842
        %v863 = vpack.c.bf16 %v847, %v845
        %v864 = vpack.c.bf16 %v848, %v846
        %v865 = vld [vmem:[%s4] sm:$0xff]
        %v866 = vld [vmem:[%s4 + $0x8] sm:$0xff]
        %v867 = vld [vmem:[%s4 + $0x10] sm:$0xff]
        %v868 = vld [vmem:[%s4 + $0x18] sm:$0xff]
        %v869 = vld [vmem:[%s4 + $0x20] sm:$0xff]
        %v870 = vld [vmem:[%s4 + $0x28] sm:$0xff]
        %v871 = vld [vmem:[%s4 + $0x30] sm:$0xff]
        %v872 = vld [vmem:[%s4 + $0x38] sm:$0xff]
        %v873 = vld [vmem:[%s4 + $0x40] sm:$0xff]
        %v874 = vld [vmem:[%s4 + $0x48] sm:$0xff]
        %v875 = vld [vmem:[%s4 + $0x50] sm:$0xff]
        %v876 = vld [vmem:[%s4 + $0x58] sm:$0xff]
        %v877 = vld [vmem:[%s4 + $0x60] sm:$0xff]
        %v878 = vld [vmem:[%s4 + $0x68] sm:$0xff]
        %v879 = vld [vmem:[%s4 + $0x70] sm:$0xff]
        %v880 = vld [vmem:[%s4 + $0x78] sm:$0xff]
        %v881 = vld [vmem:[%s4 + $0x80] sm:$0xff]
        %v882 = vld [vmem:[%s4 + $0x88] sm:$0xff]
        %v883 = vld [vmem:[%s4 + $0x90] sm:$0xff]
        %v884 = vld [vmem:[%s4 + $0x98] sm:$0xff]
        %v885 = vld [vmem:[%s4 + $0xa0] sm:$0xff]
        %v886 = vld [vmem:[%s4 + $0xa8] sm:$0xff]
        %v887 = vld [vmem:[%s4 + $0xb0] sm:$0xff]
        %v888 = vld [vmem:[%s4 + $0xb8] sm:$0xff]
        %v889 = vld [vmem:[%s4 + $0xc0] sm:$0xff]
        %v890 = vld [vmem:[%s4 + $0xc8] sm:$0xff]
        %v891 = vld [vmem:[%s4 + $0xd0] sm:$0xff]
        %v892 = vld [vmem:[%s4 + $0xd8] sm:$0xff]
        %v893 = vld [vmem:[%s4 + $0xe0] sm:$0xff]
        %v894 = vld [vmem:[%s4 + $0xe8] sm:$0xff]
        %v895 = vld [vmem:[%s4 + $0xf0] sm:$0xff]
        %v896 = vld [vmem:[%s4 + $0xf8] sm:$0xff]
        %v897 = vld [vmem:[%s5] sm:$0x3]
        %v899 = vlaneseq
        %v900 = vshrl.u32 %v899, 7
        %v901 = vsub.s32 0, %v900
        %v902 = vrot.slane %v897, %v901
        %v903 = vlaneseq
        %v904 = vshrl.u32 %v903, 7
        %v905 = vsub.s32 1, %v904
        %v906 = vrot.slane %v897, %v905
        %v941 = vunpack.c.l.b16 %v865
        %v942 = vunpack.c.h.b16 %v865
        %v943 = vunpack.c.l.b16 %v866
        %v944 = vunpack.c.h.b16 %v866
        %v945 = vunpack.c.l.b16 %v867
        %v946 = vunpack.c.h.b16 %v867
        %v947 = vunpack.c.l.b16 %v868
        %v948 = vunpack.c.h.b16 %v868
        %v949 = vunpack.c.l.b16 %v869
        %v950 = vunpack.c.h.b16 %v869
        %v951 = vunpack.c.l.b16 %v870
        %v952 = vunpack.c.h.b16 %v870
        %v953 = vunpack.c.l.b16 %v871
        %v954 = vunpack.c.h.b16 %v871
        %v955 = vunpack.c.l.b16 %v872
        %v956 = vunpack.c.h.b16 %v872
        %v957 = vunpack.c.l.b16 %v873
        %v958 = vunpack.c.h.b16 %v873
        %v959 = vunpack.c.l.b16 %v874
        %v960 = vunpack.c.h.b16 %v874
        %v961 = vunpack.c.l.b16 %v875
        %v962 = vunpack.c.h.b16 %v875
        %v963 = vunpack.c.l.b16 %v876
        %v964 = vunpack.c.h.b16 %v876
        %v965 = vunpack.c.l.b16 %v877
        %v966 = vunpack.c.h.b16 %v877
        %v967 = vunpack.c.l.b16 %v878
        %v968 = vunpack.c.h.b16 %v878
        %v969 = vunpack.c.l.b16 %v879
        %v970 = vunpack.c.h.b16 %v879
        %v971 = vunpack.c.l.b16 %v880
        %v972 = vunpack.c.h.b16 %v880
        %v973 = vunpack.c.l.b16 %v881
        %v974 = vunpack.c.h.b16 %v881
        %v975 = vunpack.c.l.b16 %v882
        %v976 = vunpack.c.h.b16 %v882
        %v977 = vunpack.c.l.b16 %v883
        %v978 = vunpack.c.h.b16 %v883
        %v979 = vunpack.c.l.b16 %v884
        %v980 = vunpack.c.h.b16 %v884
        %v981 = vunpack.c.l.b16 %v885
        %v982 = vunpack.c.h.b16 %v885
        %v983 = vunpack.c.l.b16 %v886
        %v984 = vunpack.c.h.b16 %v886
        %v985 = vunpack.c.l.b16 %v887
        %v986 = vunpack.c.h.b16 %v887
        %v987 = vunpack.c.l.b16 %v888
        %v988 = vunpack.c.h.b16 %v888
        %v989 = vunpack.c.l.b16 %v889
        %v990 = vunpack.c.h.b16 %v889
        %v991 = vunpack.c.l.b16 %v890
        %v992 = vunpack.c.h.b16 %v890
        %v993 = vunpack.c.l.b16 %v891
        %v994 = vunpack.c.h.b16 %v891
        %v995 = vunpack.c.l.b16 %v892
        %v996 = vunpack.c.h.b16 %v892
        %v997 = vunpack.c.l.b16 %v893
        %v998 = vunpack.c.h.b16 %v893
        %v999 = vunpack.c.l.b16 %v894
        %v1000 = vunpack.c.h.b16 %v894
        %v1001 = vunpack.c.l.b16 %v895
        %v1002 = vunpack.c.h.b16 %v895
        %v1003 = vunpack.c.l.b16 %v896
        %v1004 = vunpack.c.h.b16 %v896
        %v1005 = vpack.c.b16 %v943, %v941
        %v1006 = vpack.c.b16 %v944, %v942
        %v1007 = vpack.c.b16 %v947, %v945
        %v1008 = vpack.c.b16 %v948, %v946
        %v1009 = vpack.c.b16 %v951, %v949
        %v1010 = vpack.c.b16 %v952, %v950
        %v1011 = vpack.c.b16 %v955, %v953
        %v1012 = vpack.c.b16 %v956, %v954
        %v1013 = vpack.c.b16 %v959, %v957
        %v1014 = vpack.c.b16 %v960, %v958
        %v1015 = vpack.c.b16 %v963, %v961
        %v1016 = vpack.c.b16 %v964, %v962
        %v1017 = vpack.c.b16 %v967, %v965
        %v1018 = vpack.c.b16 %v968, %v966
        %v1019 = vpack.c.b16 %v971, %v969
        %v1020 = vpack.c.b16 %v972, %v970
        %v1021 = vpack.c.b16 %v975, %v973
        %v1022 = vpack.c.b16 %v976, %v974
        %v1023 = vpack.c.b16 %v979, %v977
        %v1024 = vpack.c.b16 %v980, %v978
        %v1025 = vpack.c.b16 %v983, %v981
        %v1026 = vpack.c.b16 %v984, %v982
        %v1027 = vpack.c.b16 %v987, %v985
        %v1028 = vpack.c.b16 %v988, %v986
        %v1029 = vpack.c.b16 %v991, %v989
        %v1030 = vpack.c.b16 %v992, %v990
        %v1031 = vpack.c.b16 %v995, %v993
        %v1032 = vpack.c.b16 %v996, %v994
        %v1033 = vpack.c.b16 %v999, %v997
        %v1034 = vpack.c.b16 %v1000, %v998
        %v1035 = vpack.c.b16 %v1003, %v1001
        %v1036 = vpack.c.b16 %v1004, %v1002
        %1069 = vmatprep.subr.bf16.mxu0 %v1020
        %1070 = vmatpush1.bf16.msra.mxu0 %v1019
        %1071 = vmatprep.subr.bf16.mxu0 %v1018
        %1072 = vmatpush1.bf16.msra.mxu0 %v1017
        %1073 = vmatprep.subr.bf16.mxu0 %v1016
        %1074 = vmatpush1.bf16.msra.mxu0 %v1015
        %1075 = vmatprep.subr.bf16.mxu0 %v1014
        %1076 = vmatpush1.bf16.msra.mxu0 %v1013
        %1077 = vmatprep.subr.bf16.mxu0 %v1012
        %1078 = vmatpush1.bf16.msra.mxu0 %v1011
        %1079 = vmatprep.subr.bf16.mxu0 %v1010
        %1080 = vmatpush1.bf16.msra.mxu0 %v1009
        %1081 = vmatprep.subr.bf16.mxu0 %v1008
        %1082 = vmatpush1.bf16.msra.mxu0 %v1007
        %1083 = vmatprep.subr.bf16.mxu0 %v1006
        %1084 = vmatpush1.bf16.msra.mxu0 %v1005
        %1085 = vmatprep.subr.bf16.mxu0 %v1036
        %1086 = vmatpush2.bf16.msra.mxu0 %v1035
        %1087 = vmatprep.subr.bf16.mxu0 %v1034
        %1088 = vmatpush2.bf16.msra.mxu0 %v1033
        %1089 = vmatprep.subr.bf16.mxu0 %v1032
        %1090 = vmatpush2.bf16.msra.mxu0 %v1031
        %1091 = vmatprep.subr.bf16.mxu0 %v1030
        %1092 = vmatpush2.bf16.msra.mxu0 %v1029
        %1093 = vmatprep.subr.bf16.mxu0 %v1028
        %1094 = vmatpush2.bf16.msra.mxu0 %v1027
        %1095 = vmatprep.subr.bf16.mxu0 %v1026
        %1096 = vmatpush2.bf16.msra.mxu0 %v1025
        %1097 = vmatprep.subr.bf16.mxu0 %v1024
        %1098 = vmatpush2.bf16.msra.mxu0 %v1023
        %1099 = vmatprep.subr.bf16.mxu0 %v1022
        %1100 = vmatpush2.bf16.msra.mxu0 %v1021
        %1101 = vmatprep.mubr.bf16.mxu0 %v850
        %1102 = vmatmul.mubr.bf16.gmra.mxu0 %v849
        %v1103 = vpop.f32.mrf.mxu0
        %v1104 = vadd.f32 %v902, %v1103
        %v1105 = vpop.f32.mrf.mxu0
        %v1106 = vadd.f32 %v906, %v1105
        %v1107 = vpop.f32.mrf.mxu0
        %v1108 = vadd.f32 %v902, %v1107
        %v1109 = vpop.f32.mrf.mxu0
        %v1110 = vadd.f32 %v906, %v1109
        %1111 = vmatprep.mubr.bf16.mxu0 %v852
        %1112 = vmatmul.mubr.bf16.gmra.mxu0 %v851
        %v1113 = vpop.f32.mrf.mxu0
        %v1114 = vadd.f32 %v902, %v1113
        %v1115 = vpop.f32.mrf.mxu0
        %v1116 = vadd.f32 %v906, %v1115
        %v1117 = vpop.f32.mrf.mxu0
        %v1118 = vadd.f32 %v902, %v1117
        %v1119 = vpop.f32.mrf.mxu0
        %v1120 = vadd.f32 %v906, %v1119
        %1121 = vmatprep.mubr.bf16.mxu0 %v854
        %1122 = vmatmul.mubr.bf16.gmra.mxu0 %v853
        %v1123 = vpop.f32.mrf.mxu0
        %v1124 = vadd.f32 %v902, %v1123
        %v1125 = vpop.f32.mrf.mxu0
        %v1126 = vadd.f32 %v906, %v1125
        %v1127 = vpop.f32.mrf.mxu0
        %v1128 = vadd.f32 %v902, %v1127
        %v1129 = vpop.f32.mrf.mxu0
        %v1130 = vadd.f32 %v906, %v1129
        %1131 = vmatprep.mubr.bf16.mxu0 %v856
        %1132 = vmatmul.mubr.bf16.gmra.mxu0 %v855
        %v1133 = vpop.f32.mrf.mxu0
        %v1134 = vadd.f32 %v902, %v1133
        %v1135 = vpop.f32.mrf.mxu0
        %v1136 = vadd.f32 %v906, %v1135
        %v1137 = vpop.f32.mrf.mxu0
        %v1138 = vadd.f32 %v902, %v1137
        %v1139 = vpop.f32.mrf.mxu0
        %v1140 = vadd.f32 %v906, %v1139
        %1141 = vmatprep.mubr.bf16.mxu0 %v858
        %1142 = vmatmul.mubr.bf16.gmra.mxu0 %v857
        %v1143 = vpop.f32.mrf.mxu0
        %v1144 = vadd.f32 %v902, %v1143
        %v1145 = vpop.f32.mrf.mxu0
        %v1146 = vadd.f32 %v906, %v1145
        %v1147 = vpop.f32.mrf.mxu0
        %v1148 = vadd.f32 %v902, %v1147
        %v1149 = vpop.f32.mrf.mxu0
        %v1150 = vadd.f32 %v906, %v1149
        %1151 = vmatprep.mubr.bf16.mxu0 %v860
        %1152 = vmatmul.mubr.bf16.gmra.mxu0 %v859
        %v1153 = vpop.f32.mrf.mxu0
        %v1154 = vadd.f32 %v902, %v1153
        %v1155 = vpop.f32.mrf.mxu0
        %v1156 = vadd.f32 %v906, %v1155
        %v1157 = vpop.f32.mrf.mxu0
        %v1158 = vadd.f32 %v902, %v1157
        %v1159 = vpop.f32.mrf.mxu0
        %v1160 = vadd.f32 %v906, %v1159
        %1161 = vmatprep.mubr.bf16.mxu0 %v862
        %1162 = vmatmul.mubr.bf16.gmra.mxu0 %v861
        %v1163 = vpop.f32.mrf.mxu0
        %v1164 = vadd.f32 %v902, %v1163
        %v1165 = vpop.f32.mrf.mxu0
        %v1166 = vadd.f32 %v906, %v1165
        %v1167 = vpop.f32.mrf.mxu0
        %v1168 = vadd.f32 %v902, %v1167
        %v1169 = vpop.f32.mrf.mxu0
        %v1170 = vadd.f32 %v906, %v1169
        %1171 = vmatprep.mubr.bf16.mxu0 %v864
        %1172 = vmatmul.mubr.bf16.gmra.mxu0 %v863
        %v1173 = vpop.f32.mrf.mxu0
        %v1174 = vadd.f32 %v902, %v1173
        %v1175 = vpop.f32.mrf.mxu0
        %v1176 = vadd.f32 %v906, %v1175
        %v1177 = vpop.f32.mrf.mxu0
        %v1178 = vadd.f32 %v902, %v1177
        %v1179 = vpop.f32.mrf.mxu0
        %v1180 = vadd.f32 %v906, %v1179
        %1181 = vdwg.mxu0
        %v1182 = vpack.c.bf16 %v1108, %v1104
        %v1183 = vpack.c.bf16 %v1110, %v1106
        %v1184 = vpack.c.bf16 %v1118, %v1114
        %v1185 = vpack.c.bf16 %v1120, %v1116
        %v1186 = vpack.c.bf16 %v1128, %v1124
        %v1187 = vpack.c.bf16 %v1130, %v1126
        %v1188 = vpack.c.bf16 %v1138, %v1134
        %v1189 = vpack.c.bf16 %v1140, %v1136
        %v1190 = vpack.c.bf16 %v1148, %v1144
        %v1191 = vpack.c.bf16 %v1150, %v1146
        %v1192 = vpack.c.bf16 %v1158, %v1154
        %v1193 = vpack.c.bf16 %v1160, %v1156
        %v1194 = vpack.c.bf16 %v1168, %v1164
        %v1195 = vpack.c.bf16 %v1170, %v1166
        %v1196 = vpack.c.bf16 %v1178, %v1174
        %v1197 = vpack.c.bf16 %v1180, %v1176
        %1198 = vmatprep.subr.bf16.mxu0 %v1197
        %1199 = vmatpush1.bf16.msra.mxu0 %v1196
        %1200 = vmatprep.subr.bf16.mxu0 %v1195
        %1201 = vmatpush1.bf16.msra.mxu0 %v1194
        %1202 = vmatprep.subr.bf16.mxu0 %v1193
        %1203 = vmatpush1.bf16.msra.mxu0 %v1192
        %1204 = vmatprep.subr.bf16.mxu0 %v1191
        %1205 = vmatpush1.bf16.msra.mxu0 %v1190
        %1206 = vmatprep.subr.bf16.mxu0 %v1189
        %1207 = vmatpush1.bf16.msra.mxu0 %v1188
        %1208 = vmatprep.subr.bf16.mxu0 %v1187
        %1209 = vmatpush1.bf16.msra.mxu0 %v1186
        %1210 = vmatprep.subr.bf16.mxu0 %v1185
        %1211 = vmatpush1.bf16.msra.mxu0 %v1184
        %1212 = vmatprep.subr.bf16.mxu0 %v1183
        %1213 = vmatpush1.bf16.msra.mxu0 %v1182
        %1214 = vmatprep.subr.bf16.mxu0 0
        %1215 = vmatpush2.bf16.msra.mxu0 0
        %1216 = vmatprep.subr.bf16.mxu0 0
        %1217 = vmatpush2.bf16.msra.mxu0 0
        %1218 = vmatprep.subr.bf16.mxu0 0
        %1219 = vmatpush2.bf16.msra.mxu0 0
        %1220 = vmatprep.subr.bf16.mxu0 0
        %1221 = vmatpush2.bf16.msra.mxu0 0
        %1222 = vmatprep.subr.bf16.mxu0 0
        %1223 = vmatpush2.bf16.msra.mxu0 0
        %1224 = vmatprep.subr.bf16.mxu0 0
        %1225 = vmatpush2.bf16.msra.mxu0 0
        %1226 = vmatprep.subr.bf16.mxu0 0
        %1227 = vmatpush2.bf16.msra.mxu0 0
        %1228 = vmatprep.subr.bf16.mxu0 0
        %1229 = vmatpush2.bf16.msra.mxu0 0
        %1230 = vmatprep.mubr.bf16.mxu0 0
        %1231 = vmatmul.mubr.bf16.gmra.mxu0 %v411
        %v1232 = vpop.f32.mrf.mxu0
        %v1233 = vadd.f32 0.0, %v1232
        %v1234 = vpop.f32.mrf.mxu0
        %v1235 = vadd.f32 0.0, %v1234
        %v1236 = vpop.f32.mrf.mxu0
        %v1237 = vadd.f32 0.0, %v1236
        %v1238 = vpop.f32.mrf.mxu0
        %v1239 = vadd.f32 0.0, %v1238
        %1240 = vmatprep.mubr.bf16.mxu0 0
        %1241 = vmatmul.mubr.bf16.gmra.mxu0 %v412
        %v1242 = vpop.f32.mrf.mxu0
        %v1243 = vadd.f32 0.0, %v1242
        %v1244 = vpop.f32.mrf.mxu0
        %v1245 = vadd.f32 0.0, %v1244
        %v1246 = vpop.f32.mrf.mxu0
        %v1247 = vadd.f32 0.0, %v1246
        %v1248 = vpop.f32.mrf.mxu0
        %v1249 = vadd.f32 0.0, %v1248
        %1250 = vmatprep.mubr.bf16.mxu0 0
        %1251 = vmatmul.mubr.bf16.gmra.mxu0 %v413
        %v1252 = vpop.f32.mrf.mxu0
        %v1253 = vadd.f32 0.0, %v1252
        %v1254 = vpop.f32.mrf.mxu0
        %v1255 = vadd.f32 0.0, %v1254
        %v1256 = vpop.f32.mrf.mxu0
        %v1257 = vadd.f32 0.0, %v1256
        %v1258 = vpop.f32.mrf.mxu0
        %v1259 = vadd.f32 0.0, %v1258
        %1260 = vmatprep.mubr.bf16.mxu0 0
        %1261 = vmatmul.mubr.bf16.gmra.mxu0 %v414
        %v1262 = vpop.f32.mrf.mxu0
        %v1263 = vadd.f32 0.0, %v1262
        %v1264 = vpop.f32.mrf.mxu0
        %v1265 = vadd.f32 0.0, %v1264
        %v1266 = vpop.f32.mrf.mxu0
        %v1267 = vadd.f32 0.0, %v1266
        %v1268 = vpop.f32.mrf.mxu0
        %v1269 = vadd.f32 0.0, %v1268
        %1270 = vmatprep.mubr.bf16.mxu0 0
        %1271 = vmatmul.mubr.bf16.gmra.mxu0 %v415
        %v1272 = vpop.f32.mrf.mxu0
        %v1273 = vadd.f32 0.0, %v1272
        %v1274 = vpop.f32.mrf.mxu0
        %v1275 = vadd.f32 0.0, %v1274
        %v1276 = vpop.f32.mrf.mxu0
        %v1277 = vadd.f32 0.0, %v1276
        %v1278 = vpop.f32.mrf.mxu0
        %v1279 = vadd.f32 0.0, %v1278
        %1280 = vmatprep.mubr.bf16.mxu0 0
        %1281 = vmatmul.mubr.bf16.gmra.mxu0 %v416
        %v1282 = vpop.f32.mrf.mxu0
        %v1283 = vadd.f32 0.0, %v1282
        %v1284 = vpop.f32.mrf.mxu0
        %v1285 = vadd.f32 0.0, %v1284
        %v1286 = vpop.f32.mrf.mxu0
        %v1287 = vadd.f32 0.0, %v1286
        %v1288 = vpop.f32.mrf.mxu0
        %v1289 = vadd.f32 0.0, %v1288
        %1290 = vmatprep.mubr.bf16.mxu0 0
        %1291 = vmatmul.mubr.bf16.gmra.mxu0 %v417
        %v1292 = vpop.f32.mrf.mxu0
        %v1293 = vadd.f32 0.0, %v1292
        %v1294 = vpop.f32.mrf.mxu0
        %v1295 = vadd.f32 0.0, %v1294
        %v1296 = vpop.f32.mrf.mxu0
        %v1297 = vadd.f32 0.0, %v1296
        %v1298 = vpop.f32.mrf.mxu0
        %v1299 = vadd.f32 0.0, %v1298
        %1300 = vmatprep.mubr.bf16.mxu0 0
        %1301 = vmatmul.mubr.bf16.gmra.mxu0 %v418
        %v1302 = vpop.f32.mrf.mxu0
        %v1303 = vadd.f32 0.0, %v1302
        %v1304 = vpop.f32.mrf.mxu0
        %v1305 = vadd.f32 0.0, %v1304
        %v1306 = vpop.f32.mrf.mxu0
        %v1307 = vadd.f32 0.0, %v1306
        %v1308 = vpop.f32.mrf.mxu0
        %v1309 = vadd.f32 0.0, %v1308
        %1310 = vdwg.mxu0
        %v1311 = vmax.f32 %v1233, 0.0
        %v1312 = vmax.f32 %v1235, 0.0
        %v1313 = vmax.f32 %v1237, 0.0
        %v1314 = vmax.f32 %v1239, 0.0
        %v1315 = vmax.f32 %v1243, 0.0
        %v1316 = vmax.f32 %v1245, 0.0
        %v1317 = vmax.f32 %v1247, 0.0
        %v1318 = vmax.f32 %v1249, 0.0
        %v1319 = vmax.f32 %v1253, 0.0
        %v1320 = vmax.f32 %v1255, 0.0
        %v1321 = vmax.f32 %v1257, 0.0
        %v1322 = vmax.f32 %v1259, 0.0
        %v1323 = vmax.f32 %v1263, 0.0
        %v1324 = vmax.f32 %v1265, 0.0
        %v1325 = vmax.f32 %v1267, 0.0
        %v1326 = vmax.f32 %v1269, 0.0
        %v1327 = vmax.f32 %v1273, 0.0
        %v1328 = vmax.f32 %v1275, 0.0
        %v1329 = vmax.f32 %v1277, 0.0
        %v1330 = vmax.f32 %v1279, 0.0
        %v1331 = vmax.f32 %v1283, 0.0
        %v1332 = vmax.f32 %v1285, 0.0
        %v1333 = vmax.f32 %v1287, 0.0
        %v1334 = vmax.f32 %v1289, 0.0
        %v1335 = vmax.f32 %v1293, 0.0
        %v1336 = vmax.f32 %v1295, 0.0
        %v1337 = vmax.f32 %v1297, 0.0
        %v1338 = vmax.f32 %v1299, 0.0
        %v1339 = vmax.f32 %v1303, 0.0
        %v1340 = vmax.f32 %v1305, 0.0
        %v1341 = vmax.f32 %v1307, 0.0
        %v1342 = vmax.f32 %v1309, 0.0
        %v1343 = vpack.c.bf16 %v1313, %v1311
        %v1344 = vpack.c.bf16 %v1314, %v1312
        %v1345 = vpack.c.bf16 %v1317, %v1315
        %v1346 = vpack.c.bf16 %v1318, %v1316
        %v1347 = vpack.c.bf16 %v1321, %v1319
        %v1348 = vpack.c.bf16 %v1322, %v1320
        %v1349 = vpack.c.bf16 %v1325, %v1323
        %v1350 = vpack.c.bf16 %v1326, %v1324
        %v1351 = vpack.c.bf16 %v1329, %v1327
        %v1352 = vpack.c.bf16 %v1330, %v1328
        %v1353 = vpack.c.bf16 %v1333, %v1331
        %v1354 = vpack.c.bf16 %v1334, %v1332
        %v1355 = vpack.c.bf16 %v1337, %v1335
        %v1356 = vpack.c.bf16 %v1338, %v1336
        %v1357 = vpack.c.bf16 %v1341, %v1339
        %v1358 = vpack.c.bf16 %v1342, %v1340
        %v1359 = vld [vmem:[%s6] sm:$0xff]
        %v1360 = vld [vmem:[%s6 + $0x8] sm:$0xff]
        %v1361 = vld [vmem:[%s6 + $0x10] sm:$0xff]
        %v1362 = vld [vmem:[%s6 + $0x18] sm:$0xff]
        %v1363 = vld [vmem:[%s6 + $0x20] sm:$0xff]
        %v1364 = vld [vmem:[%s6 + $0x28] sm:$0xff]
        %v1365 = vld [vmem:[%s6 + $0x30] sm:$0xff]
        %v1366 = vld [vmem:[%s6 + $0x38] sm:$0xff]
        %v1367 = vld [vmem:[%s6 + $0x40] sm:$0xff]
        %v1368 = vld [vmem:[%s6 + $0x48] sm:$0xff]
        %v1369 = vld [vmem:[%s6 + $0x50] sm:$0xff]
        %v1370 = vld [vmem:[%s6 + $0x58] sm:$0xff]
        %v1371 = vld [vmem:[%s6 + $0x60] sm:$0xff]
        %v1372 = vld [vmem:[%s6 + $0x68] sm:$0xff]
        %v1373 = vld [vmem:[%s6 + $0x70] sm:$0xff]
        %v1374 = vld [vmem:[%s6 + $0x78] sm:$0xff]
        %v1375 = vld [vmem:[%s6 + $0x80] sm:$0xff]
        %v1376 = vld [vmem:[%s6 + $0x88] sm:$0xff]
        %v1377 = vld [vmem:[%s6 + $0x90] sm:$0xff]
        %v1378 = vld [vmem:[%s6 + $0x98] sm:$0xff]
        %v1379 = vld [vmem:[%s6 + $0xa0] sm:$0xff]
        %v1380 = vld [vmem:[%s6 + $0xa8] sm:$0xff]
        %v1381 = vld [vmem:[%s6 + $0xb0] sm:$0xff]
        %v1382 = vld [vmem:[%s6 + $0xb8] sm:$0xff]
        %v1383 = vld [vmem:[%s6 + $0xc0] sm:$0xff]
        %v1384 = vld [vmem:[%s6 + $0xc8] sm:$0xff]
        %v1385 = vld [vmem:[%s6 + $0xd0] sm:$0xff]
        %v1386 = vld [vmem:[%s6 + $0xd8] sm:$0xff]
        %v1387 = vld [vmem:[%s6 + $0xe0] sm:$0xff]
        %v1388 = vld [vmem:[%s6 + $0xe8] sm:$0xff]
        %v1389 = vld [vmem:[%s6 + $0xf0] sm:$0xff]
        %v1390 = vld [vmem:[%s6 + $0xf8] sm:$0xff]
        %v1391 = vld [vmem:[%s7] sm:$0x3]
        %v1393 = vlaneseq
        %v1394 = vshrl.u32 %v1393, 7
        %v1395 = vsub.s32 0, %v1394
        %v1396 = vrot.slane %v1391, %v1395
        %v1397 = vlaneseq
        %v1398 = vshrl.u32 %v1397, 7
        %v1399 = vsub.s32 1, %v1398
        %v1400 = vrot.slane %v1391, %v1399
        %v1435 = vunpack.c.l.b16 %v1359
        %v1436 = vunpack.c.h.b16 %v1359
        %v1437 = vunpack.c.l.b16 %v1360
        %v1438 = vunpack.c.h.b16 %v1360
        %v1439 = vunpack.c.l.b16 %v1361
        %v1440 = vunpack.c.h.b16 %v1361
        %v1441 = vunpack.c.l.b16 %v1362
        %v1442 = vunpack.c.h.b16 %v1362
        %v1443 = vunpack.c.l.b16 %v1363
        %v1444 = vunpack.c.h.b16 %v1363
        %v1445 = vunpack.c.l.b16 %v1364
        %v1446 = vunpack.c.h.b16 %v1364
        %v1447 = vunpack.c.l.b16 %v1365
        %v1448 = vunpack.c.h.b16 %v1365
        %v1449 = vunpack.c.l.b16 %v1366
        %v1450 = vunpack.c.h.b16 %v1366
        %v1451 = vunpack.c.l.b16 %v1367
        %v1452 = vunpack.c.h.b16 %v1367
        %v1453 = vunpack.c.l.b16 %v1368
        %v1454 = vunpack.c.h.b16 %v1368
        %v1455 = vunpack.c.l.b16 %v1369
        %v1456 = vunpack.c.h.b16 %v1369
        %v1457 = vunpack.c.l.b16 %v1370
        %v1458 = vunpack.c.h.b16 %v1370
        %v1459 = vunpack.c.l.b16 %v1371
        %v1460 = vunpack.c.h.b16 %v1371
        %v1461 = vunpack.c.l.b16 %v1372
        %v1462 = vunpack.c.h.b16 %v1372
        %v1463 = vunpack.c.l.b16 %v1373
        %v1464 = vunpack.c.h.b16 %v1373
        %v1465 = vunpack.c.l.b16 %v1374
        %v1466 = vunpack.c.h.b16 %v1374
        %v1467 = vunpack.c.l.b16 %v1375
        %v1468 = vunpack.c.h.b16 %v1375
        %v1469 = vunpack.c.l.b16 %v1376
        %v1470 = vunpack.c.h.b16 %v1376
        %v1471 = vunpack.c.l.b16 %v1377
        %v1472 = vunpack.c.h.b16 %v1377
        %v1473 = vunpack.c.l.b16 %v1378
        %v1474 = vunpack.c.h.b16 %v1378
        %v1475 = vunpack.c.l.b16 %v1379
        %v1476 = vunpack.c.h.b16 %v1379
        %v1477 = vunpack.c.l.b16 %v1380
        %v1478 = vunpack.c.h.b16 %v1380
        %v1479 = vunpack.c.l.b16 %v1381
        %v1480 = vunpack.c.h.b16 %v1381
        %v1481 = vunpack.c.l.b16 %v1382
        %v1482 = vunpack.c.h.b16 %v1382
        %v1483 = vunpack.c.l.b16 %v1383
        %v1484 = vunpack.c.h.b16 %v1383
        %v1485 = vunpack.c.l.b16 %v1384
        %v1486 = vunpack.c.h.b16 %v1384
        %v1487 = vunpack.c.l.b16 %v1385
        %v1488 = vunpack.c.h.b16 %v1385
        %v1489 = vunpack.c.l.b16 %v1386
        %v1490 = vunpack.c.h.b16 %v1386
        %v1491 = vunpack.c.l.b16 %v1387
        %v1492 = vunpack.c.h.b16 %v1387
        %v1493 = vunpack.c.l.b16 %v1388
        %v1494 = vunpack.c.h.b16 %v1388
        %v1495 = vunpack.c.l.b16 %v1389
        %v1496 = vunpack.c.h.b16 %v1389
        %v1497 = vunpack.c.l.b16 %v1390
        %v1498 = vunpack.c.h.b16 %v1390
        %v1499 = vpack.c.b16 %v1437, %v1435
        %v1500 = vpack.c.b16 %v1438, %v1436
        %v1501 = vpack.c.b16 %v1441, %v1439
        %v1502 = vpack.c.b16 %v1442, %v1440
        %v1503 = vpack.c.b16 %v1445, %v1443
        %v1504 = vpack.c.b16 %v1446, %v1444
        %v1505 = vpack.c.b16 %v1449, %v1447
        %v1506 = vpack.c.b16 %v1450, %v1448
        %v1507 = vpack.c.b16 %v1453, %v1451
        %v1508 = vpack.c.b16 %v1454, %v1452
        %v1509 = vpack.c.b16 %v1457, %v1455
        %v1510 = vpack.c.b16 %v1458, %v1456
        %v1511 = vpack.c.b16 %v1461, %v1459
        %v1512 = vpack.c.b16 %v1462, %v1460
        %v1513 = vpack.c.b16 %v1465, %v1463
        %v1514 = vpack.c.b16 %v1466, %v1464
        %v1515 = vpack.c.b16 %v1469, %v1467
        %v1516 = vpack.c.b16 %v1470, %v1468
        %v1517 = vpack.c.b16 %v1473, %v1471
        %v1518 = vpack.c.b16 %v1474, %v1472
        %v1519 = vpack.c.b16 %v1477, %v1475
        %v1520 = vpack.c.b16 %v1478, %v1476
        %v1521 = vpack.c.b16 %v1481, %v1479
        %v1522 = vpack.c.b16 %v1482, %v1480
        %v1523 = vpack.c.b16 %v1485, %v1483
        %v1524 = vpack.c.b16 %v1486, %v1484
        %v1525 = vpack.c.b16 %v1489, %v1487
        %v1526 = vpack.c.b16 %v1490, %v1488
        %v1527 = vpack.c.b16 %v1493, %v1491
        %v1528 = vpack.c.b16 %v1494, %v1492
        %v1529 = vpack.c.b16 %v1497, %v1495
        %v1530 = vpack.c.b16 %v1498, %v1496
        %1563 = vmatprep.subr.bf16.mxu0 %v1514
        %1564 = vmatpush1.bf16.msra.mxu0 %v1513
        %1565 = vmatprep.subr.bf16.mxu0 %v1512
        %1566 = vmatpush1.bf16.msra.mxu0 %v1511
        %1567 = vmatprep.subr.bf16.mxu0 %v1510
        %1568 = vmatpush1.bf16.msra.mxu0 %v1509
        %1569 = vmatprep.subr.bf16.mxu0 %v1508
        %1570 = vmatpush1.bf16.msra.mxu0 %v1507
        %1571 = vmatprep.subr.bf16.mxu0 %v1506
        %1572 = vmatpush1.bf16.msra.mxu0 %v1505
        %1573 = vmatprep.subr.bf16.mxu0 %v1504
        %1574 = vmatpush1.bf16.msra.mxu0 %v1503
        %1575 = vmatprep.subr.bf16.mxu0 %v1502
        %1576 = vmatpush1.bf16.msra.mxu0 %v1501
        %1577 = vmatprep.subr.bf16.mxu0 %v1500
        %1578 = vmatpush1.bf16.msra.mxu0 %v1499
        %1579 = vmatprep.subr.bf16.mxu0 %v1530
        %1580 = vmatpush2.bf16.msra.mxu0 %v1529
        %1581 = vmatprep.subr.bf16.mxu0 %v1528
        %1582 = vmatpush2.bf16.msra.mxu0 %v1527
        %1583 = vmatprep.subr.bf16.mxu0 %v1526
        %1584 = vmatpush2.bf16.msra.mxu0 %v1525
        %1585 = vmatprep.subr.bf16.mxu0 %v1524
        %1586 = vmatpush2.bf16.msra.mxu0 %v1523
        %1587 = vmatprep.subr.bf16.mxu0 %v1522
        %1588 = vmatpush2.bf16.msra.mxu0 %v1521
        %1589 = vmatprep.subr.bf16.mxu0 %v1520
        %1590 = vmatpush2.bf16.msra.mxu0 %v1519
        %1591 = vmatprep.subr.bf16.mxu0 %v1518
        %1592 = vmatpush2.bf16.msra.mxu0 %v1517
        %1593 = vmatprep.subr.bf16.mxu0 %v1516
        %1594 = vmatpush2.bf16.msra.mxu0 %v1515
        %1595 = vmatprep.mubr.bf16.mxu0 %v1344
        %1596 = vmatmul.mubr.bf16.gmra.mxu0 %v1343
        %v1597 = vpop.f32.mrf.mxu0
        %v1598 = vadd.f32 %v1396, %v1597
        %v1599 = vpop.f32.mrf.mxu0
        %v1600 = vadd.f32 %v1400, %v1599
        %v1601 = vpop.f32.mrf.mxu0
        %v1602 = vadd.f32 %v1396, %v1601
        %v1603 = vpop.f32.mrf.mxu0
        %v1604 = vadd.f32 %v1400, %v1603
        %1605 = vmatprep.mubr.bf16.mxu0 %v1346
        %1606 = vmatmul.mubr.bf16.gmra.mxu0 %v1345
        %v1607 = vpop.f32.mrf.mxu0
        %v1608 = vadd.f32 %v1396, %v1607
        %v1609 = vpop.f32.mrf.mxu0
        %v1610 = vadd.f32 %v1400, %v1609
        %v1611 = vpop.f32.mrf.mxu0
        %v1612 = vadd.f32 %v1396, %v1611
        %v1613 = vpop.f32.mrf.mxu0
        %v1614 = vadd.f32 %v1400, %v1613
        %1615 = vmatprep.mubr.bf16.mxu0 %v1348
        %1616 = vmatmul.mubr.bf16.gmra.mxu0 %v1347
        %v1617 = vpop.f32.mrf.mxu0
        %v1618 = vadd.f32 %v1396, %v1617
        %v1619 = vpop.f32.mrf.mxu0
        %v1620 = vadd.f32 %v1400, %v1619
        %v1621 = vpop.f32.mrf.mxu0
        %v1622 = vadd.f32 %v1396, %v1621
        %v1623 = vpop.f32.mrf.mxu0
        %v1624 = vadd.f32 %v1400, %v1623
        %1625 = vmatprep.mubr.bf16.mxu0 %v1350
        %1626 = vmatmul.mubr.bf16.gmra.mxu0 %v1349
        %v1627 = vpop.f32.mrf.mxu0
        %v1628 = vadd.f32 %v1396, %v1627
        %v1629 = vpop.f32.mrf.mxu0
        %v1630 = vadd.f32 %v1400, %v1629
        %v1631 = vpop.f32.mrf.mxu0
        %v1632 = vadd.f32 %v1396, %v1631
        %v1633 = vpop.f32.mrf.mxu0
        %v1634 = vadd.f32 %v1400, %v1633
        %1635 = vmatprep.mubr.bf16.mxu0 %v1352
        %1636 = vmatmul.mubr.bf16.gmra.mxu0 %v1351
        %v1637 = vpop.f32.mrf.mxu0
        %v1638 = vadd.f32 %v1396, %v1637
        %v1639 = vpop.f32.mrf.mxu0
        %v1640 = vadd.f32 %v1400, %v1639
        %v1641 = vpop.f32.mrf.mxu0
        %v1642 = vadd.f32 %v1396, %v1641
        %v1643 = vpop.f32.mrf.mxu0
        %v1644 = vadd.f32 %v1400, %v1643
        %1645 = vmatprep.mubr.bf16.mxu0 %v1354
        %1646 = vmatmul.mubr.bf16.gmra.mxu0 %v1353
        %v1647 = vpop.f32.mrf.mxu0
        %v1648 = vadd.f32 %v1396, %v1647
        %v1649 = vpop.f32.mrf.mxu0
        %v1650 = vadd.f32 %v1400, %v1649
        %v1651 = vpop.f32.mrf.mxu0
        %v1652 = vadd.f32 %v1396, %v1651
        %v1653 = vpop.f32.mrf.mxu0
        %v1654 = vadd.f32 %v1400, %v1653
        %1655 = vmatprep.mubr.bf16.mxu0 %v1356
        %1656 = vmatmul.mubr.bf16.gmra.mxu0 %v1355
        %v1657 = vpop.f32.mrf.mxu0
        %v1658 = vadd.f32 %v1396, %v1657
        %v1659 = vpop.f32.mrf.mxu0
        %v1660 = vadd.f32 %v1400, %v1659
        %v1661 = vpop.f32.mrf.mxu0
        %v1662 = vadd.f32 %v1396, %v1661
        %v1663 = vpop.f32.mrf.mxu0
        %v1664 = vadd.f32 %v1400, %v1663
        %1665 = vmatprep.mubr.bf16.mxu0 %v1358
        %1666 = vmatmul.mubr.bf16.gmra.mxu0 %v1357
        %v1667 = vpop.f32.mrf.mxu0
        %v1668 = vadd.f32 %v1396, %v1667
        %v1669 = vpop.f32.mrf.mxu0
        %v1670 = vadd.f32 %v1400, %v1669
        %v1671 = vpop.f32.mrf.mxu0
        %v1672 = vadd.f32 %v1396, %v1671
        %v1673 = vpop.f32.mrf.mxu0
        %v1674 = vadd.f32 %v1400, %v1673
        %1675 = vdwg.mxu0
        %v1676 = vpack.c.bf16 %v1602, %v1598
        %v1677 = vpack.c.bf16 %v1604, %v1600
        %v1678 = vpack.c.bf16 %v1612, %v1608
        %v1679 = vpack.c.bf16 %v1614, %v1610
        %v1680 = vpack.c.bf16 %v1622, %v1618
        %v1681 = vpack.c.bf16 %v1624, %v1620
        %v1682 = vpack.c.bf16 %v1632, %v1628
        %v1683 = vpack.c.bf16 %v1634, %v1630
        %v1684 = vpack.c.bf16 %v1642, %v1638
        %v1685 = vpack.c.bf16 %v1644, %v1640
        %v1686 = vpack.c.bf16 %v1652, %v1648
        %v1687 = vpack.c.bf16 %v1654, %v1650
        %v1688 = vpack.c.bf16 %v1662, %v1658
        %v1689 = vpack.c.bf16 %v1664, %v1660
        %v1690 = vpack.c.bf16 %v1672, %v1668
        %v1691 = vpack.c.bf16 %v1674, %v1670
        %1692 = vmatprep.subr.bf16.mxu0 %v1691
        %1693 = vmatpush1.bf16.msra.mxu0 %v1690
        %1694 = vmatprep.subr.bf16.mxu0 %v1689
        %1695 = vmatpush1.bf16.msra.mxu0 %v1688
        %1696 = vmatprep.subr.bf16.mxu0 %v1687
        %1697 = vmatpush1.bf16.msra.mxu0 %v1686
        %1698 = vmatprep.subr.bf16.mxu0 %v1685
        %1699 = vmatpush1.bf16.msra.mxu0 %v1684
        %1700 = vmatprep.subr.bf16.mxu0 %v1683
        %1701 = vmatpush1.bf16.msra.mxu0 %v1682
        %1702 = vmatprep.subr.bf16.mxu0 %v1681
        %1703 = vmatpush1.bf16.msra.mxu0 %v1680
        %1704 = vmatprep.subr.bf16.mxu0 %v1679
        %1705 = vmatpush1.bf16.msra.mxu0 %v1678
        %1706 = vmatprep.subr.bf16.mxu0 %v1677
        %1707 = vmatpush1.bf16.msra.mxu0 %v1676
        %1708 = vmatprep.subr.bf16.mxu0 0
        %1709 = vmatpush2.bf16.msra.mxu0 0
        %1710 = vmatprep.subr.bf16.mxu0 0
        %1711 = vmatpush2.bf16.msra.mxu0 0
        %1712 = vmatprep.subr.bf16.mxu0 0
        %1713 = vmatpush2.bf16.msra.mxu0 0
        %1714 = vmatprep.subr.bf16.mxu0 0
        %1715 = vmatpush2.bf16.msra.mxu0 0
        %1716 = vmatprep.subr.bf16.mxu0 0
        %1717 = vmatpush2.bf16.msra.mxu0 0
        %1718 = vmatprep.subr.bf16.mxu0 0
        %1719 = vmatpush2.bf16.msra.mxu0 0
        %1720 = vmatprep.subr.bf16.mxu0 0
        %1721 = vmatpush2.bf16.msra.mxu0 0
        %1722 = vmatprep.subr.bf16.mxu0 0
        %1723 = vmatpush2.bf16.msra.mxu0 0
        %1724 = vmatprep.mubr.bf16.mxu0 0
        %1725 = vmatmul.mubr.bf16.gmra.mxu0 %v411
        %v1726 = vpop.f32.mrf.mxu0
        %v1727 = vadd.f32 0.0, %v1726
        %v1728 = vpop.f32.mrf.mxu0
        %v1729 = vadd.f32 0.0, %v1728
        %v1730 = vpop.f32.mrf.mxu0
        %v1731 = vadd.f32 0.0, %v1730
        %v1732 = vpop.f32.mrf.mxu0
        %v1733 = vadd.f32 0.0, %v1732
        %1734 = vmatprep.mubr.bf16.mxu0 0
        %1735 = vmatmul.mubr.bf16.gmra.mxu0 %v412
        %v1736 = vpop.f32.mrf.mxu0
        %v1737 = vadd.f32 0.0, %v1736
        %v1738 = vpop.f32.mrf.mxu0
        %v1739 = vadd.f32 0.0, %v1738
        %v1740 = vpop.f32.mrf.mxu0
        %v1741 = vadd.f32 0.0, %v1740
        %v1742 = vpop.f32.mrf.mxu0
        %v1743 = vadd.f32 0.0, %v1742
        %1744 = vmatprep.mubr.bf16.mxu0 0
        %1745 = vmatmul.mubr.bf16.gmra.mxu0 %v413
        %v1746 = vpop.f32.mrf.mxu0
        %v1747 = vadd.f32 0.0, %v1746
        %v1748 = vpop.f32.mrf.mxu0
        %v1749 = vadd.f32 0.0, %v1748
        %v1750 = vpop.f32.mrf.mxu0
        %v1751 = vadd.f32 0.0, %v1750
        %v1752 = vpop.f32.mrf.mxu0
        %v1753 = vadd.f32 0.0, %v1752
        %1754 = vmatprep.mubr.bf16.mxu0 0
        %1755 = vmatmul.mubr.bf16.gmra.mxu0 %v414
        %v1756 = vpop.f32.mrf.mxu0
        %v1757 = vadd.f32 0.0, %v1756
        %v1758 = vpop.f32.mrf.mxu0
        %v1759 = vadd.f32 0.0, %v1758
        %v1760 = vpop.f32.mrf.mxu0
        %v1761 = vadd.f32 0.0, %v1760
        %v1762 = vpop.f32.mrf.mxu0
        %v1763 = vadd.f32 0.0, %v1762
        %1764 = vmatprep.mubr.bf16.mxu0 0
        %1765 = vmatmul.mubr.bf16.gmra.mxu0 %v415
        %v1766 = vpop.f32.mrf.mxu0
        %v1767 = vadd.f32 0.0, %v1766
        %v1768 = vpop.f32.mrf.mxu0
        %v1769 = vadd.f32 0.0, %v1768
        %v1770 = vpop.f32.mrf.mxu0
        %v1771 = vadd.f32 0.0, %v1770
        %v1772 = vpop.f32.mrf.mxu0
        %v1773 = vadd.f32 0.0, %v1772
        %1774 = vmatprep.mubr.bf16.mxu0 0
        %1775 = vmatmul.mubr.bf16.gmra.mxu0 %v416
        %v1776 = vpop.f32.mrf.mxu0
        %v1777 = vadd.f32 0.0, %v1776
        %v1778 = vpop.f32.mrf.mxu0
        %v1779 = vadd.f32 0.0, %v1778
        %v1780 = vpop.f32.mrf.mxu0
        %v1781 = vadd.f32 0.0, %v1780
        %v1782 = vpop.f32.mrf.mxu0
        %v1783 = vadd.f32 0.0, %v1782
        %1784 = vmatprep.mubr.bf16.mxu0 0
        %1785 = vmatmul.mubr.bf16.gmra.mxu0 %v417
        %v1786 = vpop.f32.mrf.mxu0
        %v1787 = vadd.f32 0.0, %v1786
        %v1788 = vpop.f32.mrf.mxu0
        %v1789 = vadd.f32 0.0, %v1788
        %v1790 = vpop.f32.mrf.mxu0
        %v1791 = vadd.f32 0.0, %v1790
        %v1792 = vpop.f32.mrf.mxu0
        %v1793 = vadd.f32 0.0, %v1792
        %1794 = vmatprep.mubr.bf16.mxu0 0
        %1795 = vmatmul.mubr.bf16.gmra.mxu0 %v418
        %v1796 = vpop.f32.mrf.mxu0
        %v1797 = vadd.f32 0.0, %v1796
        %v1798 = vpop.f32.mrf.mxu0
        %v1799 = vadd.f32 0.0, %v1798
        %v1800 = vpop.f32.mrf.mxu0
        %v1801 = vadd.f32 0.0, %v1800
        %v1802 = vpop.f32.mrf.mxu0
        %v1803 = vadd.f32 0.0, %v1802
        %1804 = vdwg.mxu0
        %v1805 = vmax.f32 %v1727, 0.0
        %v1806 = vmax.f32 %v1729, 0.0
        %v1807 = vmax.f32 %v1731, 0.0
        %v1808 = vmax.f32 %v1733, 0.0
        %v1809 = vmax.f32 %v1737, 0.0
        %v1810 = vmax.f32 %v1739, 0.0
        %v1811 = vmax.f32 %v1741, 0.0
        %v1812 = vmax.f32 %v1743, 0.0
        %v1813 = vmax.f32 %v1747, 0.0
        %v1814 = vmax.f32 %v1749, 0.0
        %v1815 = vmax.f32 %v1751, 0.0
        %v1816 = vmax.f32 %v1753, 0.0
        %v1817 = vmax.f32 %v1757, 0.0
        %v1818 = vmax.f32 %v1759, 0.0
        %v1819 = vmax.f32 %v1761, 0.0
        %v1820 = vmax.f32 %v1763, 0.0
        %v1821 = vmax.f32 %v1767, 0.0
        %v1822 = vmax.f32 %v1769, 0.0
        %v1823 = vmax.f32 %v1771, 0.0
        %v1824 = vmax.f32 %v1773, 0.0
        %v1825 = vmax.f32 %v1777, 0.0
        %v1826 = vmax.f32 %v1779, 0.0
        %v1827 = vmax.f32 %v1781, 0.0
        %v1828 = vmax.f32 %v1783, 0.0
        %v1829 = vmax.f32 %v1787, 0.0
        %v1830 = vmax.f32 %v1789, 0.0
        %v1831 = vmax.f32 %v1791, 0.0
        %v1832 = vmax.f32 %v1793, 0.0
        %v1833 = vmax.f32 %v1797, 0.0
        %v1834 = vmax.f32 %v1799, 0.0
        %v1835 = vmax.f32 %v1801, 0.0
        %v1836 = vmax.f32 %v1803, 0.0
        %v1837 = vpack.c.bf16 %v1807, %v1805
        %v1838 = vpack.c.bf16 %v1808, %v1806
        %v1839 = vpack.c.bf16 %v1811, %v1809
        %v1840 = vpack.c.bf16 %v1812, %v1810
        %v1841 = vpack.c.bf16 %v1815, %v1813
        %v1842 = vpack.c.bf16 %v1816, %v1814
        %v1843 = vpack.c.bf16 %v1819, %v1817
        %v1844 = vpack.c.bf16 %v1820, %v1818
        %v1845 = vpack.c.bf16 %v1823, %v1821
        %v1846 = vpack.c.bf16 %v1824, %v1822
        %v1847 = vpack.c.bf16 %v1827, %v1825
        %v1848 = vpack.c.bf16 %v1828, %v1826
        %v1849 = vpack.c.bf16 %v1831, %v1829
        %v1850 = vpack.c.bf16 %v1832, %v1830
        %v1851 = vpack.c.bf16 %v1835, %v1833
        %v1852 = vpack.c.bf16 %v1836, %v1834
        %v1853 = vld [vmem:[%s8] sm:$0xff]
        %v1854 = vld [vmem:[%s8 + $0x8] sm:$0xff]
        %v1855 = vld [vmem:[%s8 + $0x10] sm:$0xff]
        %v1856 = vld [vmem:[%s8 + $0x18] sm:$0xff]
        %v1857 = vld [vmem:[%s8 + $0x20] sm:$0xff]
        %v1858 = vld [vmem:[%s8 + $0x28] sm:$0xff]
        %v1859 = vld [vmem:[%s8 + $0x30] sm:$0xff]
        %v1860 = vld [vmem:[%s8 + $0x38] sm:$0xff]
        %v1861 = vld [vmem:[%s8 + $0x40] sm:$0xff]
        %v1862 = vld [vmem:[%s8 + $0x48] sm:$0xff]
        %v1863 = vld [vmem:[%s8 + $0x50] sm:$0xff]
        %v1864 = vld [vmem:[%s8 + $0x58] sm:$0xff]
        %v1865 = vld [vmem:[%s8 + $0x60] sm:$0xff]
        %v1866 = vld [vmem:[%s8 + $0x68] sm:$0xff]
        %v1867 = vld [vmem:[%s8 + $0x70] sm:$0xff]
        %v1868 = vld [vmem:[%s8 + $0x78] sm:$0xff]
        %v1869 = vld [vmem:[%s8 + $0x80] sm:$0xff]
        %v1870 = vld [vmem:[%s8 + $0x88] sm:$0xff]
        %v1871 = vld [vmem:[%s8 + $0x90] sm:$0xff]
        %v1872 = vld [vmem:[%s8 + $0x98] sm:$0xff]
        %v1873 = vld [vmem:[%s8 + $0xa0] sm:$0xff]
        %v1874 = vld [vmem:[%s8 + $0xa8] sm:$0xff]
        %v1875 = vld [vmem:[%s8 + $0xb0] sm:$0xff]
        %v1876 = vld [vmem:[%s8 + $0xb8] sm:$0xff]
        %v1877 = vld [vmem:[%s8 + $0xc0] sm:$0xff]
        %v1878 = vld [vmem:[%s8 + $0xc8] sm:$0xff]
        %v1879 = vld [vmem:[%s8 + $0xd0] sm:$0xff]
        %v1880 = vld [vmem:[%s8 + $0xd8] sm:$0xff]
        %v1881 = vld [vmem:[%s8 + $0xe0] sm:$0xff]
        %v1882 = vld [vmem:[%s8 + $0xe8] sm:$0xff]
        %v1883 = vld [vmem:[%s8 + $0xf0] sm:$0xff]
        %v1884 = vld [vmem:[%s8 + $0xf8] sm:$0xff]
        %v1885 = vld [vmem:[%s9] sm:$0x3]
        %v1887 = vlaneseq
        %v1888 = vshrl.u32 %v1887, 7
        %v1889 = vsub.s32 0, %v1888
        %v1890 = vrot.slane %v1885, %v1889
        %v1891 = vlaneseq
        %v1892 = vshrl.u32 %v1891, 7
        %v1893 = vsub.s32 1, %v1892
        %v1894 = vrot.slane %v1885, %v1893
        %v1929 = vunpack.c.l.b16 %v1853
        %v1930 = vunpack.c.h.b16 %v1853
        %v1931 = vunpack.c.l.b16 %v1854
        %v1932 = vunpack.c.h.b16 %v1854
        %v1933 = vunpack.c.l.b16 %v1855
        %v1934 = vunpack.c.h.b16 %v1855
        %v1935 = vunpack.c.l.b16 %v1856
        %v1936 = vunpack.c.h.b16 %v1856
        %v1937 = vunpack.c.l.b16 %v1857
        %v1938 = vunpack.c.h.b16 %v1857
        %v1939 = vunpack.c.l.b16 %v1858
        %v1940 = vunpack.c.h.b16 %v1858
        %v1941 = vunpack.c.l.b16 %v1859
        %v1942 = vunpack.c.h.b16 %v1859
        %v1943 = vunpack.c.l.b16 %v1860
        %v1944 = vunpack.c.h.b16 %v1860
        %v1945 = vunpack.c.l.b16 %v1861
        %v1946 = vunpack.c.h.b16 %v1861
        %v1947 = vunpack.c.l.b16 %v1862
        %v1948 = vunpack.c.h.b16 %v1862
        %v1949 = vunpack.c.l.b16 %v1863
        %v1950 = vunpack.c.h.b16 %v1863
        %v1951 = vunpack.c.l.b16 %v1864
        %v1952 = vunpack.c.h.b16 %v1864
        %v1953 = vunpack.c.l.b16 %v1865
        %v1954 = vunpack.c.h.b16 %v1865
        %v1955 = vunpack.c.l.b16 %v1866
        %v1956 = vunpack.c.h.b16 %v1866
        %v1957 = vunpack.c.l.b16 %v1867
        %v1958 = vunpack.c.h.b16 %v1867
        %v1959 = vunpack.c.l.b16 %v1868
        %v1960 = vunpack.c.h.b16 %v1868
        %v1961 = vunpack.c.l.b16 %v1869
        %v1962 = vunpack.c.h.b16 %v1869
        %v1963 = vunpack.c.l.b16 %v1870
        %v1964 = vunpack.c.h.b16 %v1870
        %v1965 = vunpack.c.l.b16 %v1871
        %v1966 = vunpack.c.h.b16 %v1871
        %v1967 = vunpack.c.l.b16 %v1872
        %v1968 = vunpack.c.h.b16 %v1872
        %v1969 = vunpack.c.l.b16 %v1873
        %v1970 = vunpack.c.h.b16 %v1873
        %v1971 = vunpack.c.l.b16 %v1874
        %v1972 = vunpack.c.h.b16 %v1874
        %v1973 = vunpack.c.l.b16 %v1875
        %v1974 = vunpack.c.h.b16 %v1875
        %v1975 = vunpack.c.l.b16 %v1876
        %v1976 = vunpack.c.h.b16 %v1876
        %v1977 = vunpack.c.l.b16 %v1877
        %v1978 = vunpack.c.h.b16 %v1877
        %v1979 = vunpack.c.l.b16 %v1878
        %v1980 = vunpack.c.h.b16 %v1878
        %v1981 = vunpack.c.l.b16 %v1879
        %v1982 = vunpack.c.h.b16 %v1879
        %v1983 = vunpack.c.l.b16 %v1880
        %v1984 = vunpack.c.h.b16 %v1880
        %v1985 = vunpack.c.l.b16 %v1881
        %v1986 = vunpack.c.h.b16 %v1881
        %v1987 = vunpack.c.l.b16 %v1882
        %v1988 = vunpack.c.h.b16 %v1882
        %v1989 = vunpack.c.l.b16 %v1883
        %v1990 = vunpack.c.h.b16 %v1883
        %v1991 = vunpack.c.l.b16 %v1884
        %v1992 = vunpack.c.h.b16 %v1884
        %v1993 = vpack.c.b16 %v1931, %v1929
        %v1994 = vpack.c.b16 %v1932, %v1930
        %v1995 = vpack.c.b16 %v1935, %v1933
        %v1996 = vpack.c.b16 %v1936, %v1934
        %v1997 = vpack.c.b16 %v1939, %v1937
        %v1998 = vpack.c.b16 %v1940, %v1938
        %v1999 = vpack.c.b16 %v1943, %v1941
        %v2000 = vpack.c.b16 %v1944, %v1942
        %v2001 = vpack.c.b16 %v1947, %v1945
        %v2002 = vpack.c.b16 %v1948, %v1946
        %v2003 = vpack.c.b16 %v1951, %v1949
        %v2004 = vpack.c.b16 %v1952, %v1950
        %v2005 = vpack.c.b16 %v1955, %v1953
        %v2006 = vpack.c.b16 %v1956, %v1954
        %v2007 = vpack.c.b16 %v1959, %v1957
        %v2008 = vpack.c.b16 %v1960, %v1958
        %v2009 = vpack.c.b16 %v1963, %v1961
        %v2010 = vpack.c.b16 %v1964, %v1962
        %v2011 = vpack.c.b16 %v1967, %v1965
        %v2012 = vpack.c.b16 %v1968, %v1966
        %v2013 = vpack.c.b16 %v1971, %v1969
        %v2014 = vpack.c.b16 %v1972, %v1970
        %v2015 = vpack.c.b16 %v1975, %v1973
        %v2016 = vpack.c.b16 %v1976, %v1974
        %v2017 = vpack.c.b16 %v1979, %v1977
        %v2018 = vpack.c.b16 %v1980, %v1978
        %v2019 = vpack.c.b16 %v1983, %v1981
        %v2020 = vpack.c.b16 %v1984, %v1982
        %v2021 = vpack.c.b16 %v1987, %v1985
        %v2022 = vpack.c.b16 %v1988, %v1986
        %v2023 = vpack.c.b16 %v1991, %v1989
        %v2024 = vpack.c.b16 %v1992, %v1990
        %2057 = vmatprep.subr.bf16.mxu0 %v2008
        %2058 = vmatpush1.bf16.msra.mxu0 %v2007
        %2059 = vmatprep.subr.bf16.mxu0 %v2006
        %2060 = vmatpush1.bf16.msra.mxu0 %v2005
        %2061 = vmatprep.subr.bf16.mxu0 %v2004
        %2062 = vmatpush1.bf16.msra.mxu0 %v2003
        %2063 = vmatprep.subr.bf16.mxu0 %v2002
        %2064 = vmatpush1.bf16.msra.mxu0 %v2001
        %2065 = vmatprep.subr.bf16.mxu0 %v2000
        %2066 = vmatpush1.bf16.msra.mxu0 %v1999
        %2067 = vmatprep.subr.bf16.mxu0 %v1998
        %2068 = vmatpush1.bf16.msra.mxu0 %v1997
        %2069 = vmatprep.subr.bf16.mxu0 %v1996
        %2070 = vmatpush1.bf16.msra.mxu0 %v1995
        %2071 = vmatprep.subr.bf16.mxu0 %v1994
        %2072 = vmatpush1.bf16.msra.mxu0 %v1993
        %2073 = vmatprep.subr.bf16.mxu0 %v2024
        %2074 = vmatpush2.bf16.msra.mxu0 %v2023
        %2075 = vmatprep.subr.bf16.mxu0 %v2022
        %2076 = vmatpush2.bf16.msra.mxu0 %v2021
        %2077 = vmatprep.subr.bf16.mxu0 %v2020
        %2078 = vmatpush2.bf16.msra.mxu0 %v2019
        %2079 = vmatprep.subr.bf16.mxu0 %v2018
        %2080 = vmatpush2.bf16.msra.mxu0 %v2017
        %2081 = vmatprep.subr.bf16.mxu0 %v2016
        %2082 = vmatpush2.bf16.msra.mxu0 %v2015
        %2083 = vmatprep.subr.bf16.mxu0 %v2014
        %2084 = vmatpush2.bf16.msra.mxu0 %v2013
        %2085 = vmatprep.subr.bf16.mxu0 %v2012
        %2086 = vmatpush2.bf16.msra.mxu0 %v2011
        %2087 = vmatprep.subr.bf16.mxu0 %v2010
        %2088 = vmatpush2.bf16.msra.mxu0 %v2009
        %2089 = vmatprep.mubr.bf16.mxu0 %v1838
        %2090 = vmatmul.mubr.bf16.gmra.mxu0 %v1837
        %v2091 = vpop.f32.mrf.mxu0
        %v2092 = vadd.f32 %v1890, %v2091
        %v2093 = vpop.f32.mrf.mxu0
        %v2094 = vadd.f32 %v1894, %v2093
        %v2095 = vpop.f32.mrf.mxu0
        %v2096 = vadd.f32 %v1890, %v2095
        %v2097 = vpop.f32.mrf.mxu0
        %v2098 = vadd.f32 %v1894, %v2097
        %2099 = vmatprep.mubr.bf16.mxu0 %v1840
        %2100 = vmatmul.mubr.bf16.gmra.mxu0 %v1839
        %v2101 = vpop.f32.mrf.mxu0
        %v2102 = vadd.f32 %v1890, %v2101
        %v2103 = vpop.f32.mrf.mxu0
        %v2104 = vadd.f32 %v1894, %v2103
        %v2105 = vpop.f32.mrf.mxu0
        %v2106 = vadd.f32 %v1890, %v2105
        %v2107 = vpop.f32.mrf.mxu0
        %v2108 = vadd.f32 %v1894, %v2107
        %2109 = vmatprep.mubr.bf16.mxu0 %v1842
        %2110 = vmatmul.mubr.bf16.gmra.mxu0 %v1841
        %v2111 = vpop.f32.mrf.mxu0
        %v2112 = vadd.f32 %v1890, %v2111
        %v2113 = vpop.f32.mrf.mxu0
        %v2114 = vadd.f32 %v1894, %v2113
        %v2115 = vpop.f32.mrf.mxu0
        %v2116 = vadd.f32 %v1890, %v2115
        %v2117 = vpop.f32.mrf.mxu0
        %v2118 = vadd.f32 %v1894, %v2117
        %2119 = vmatprep.mubr.bf16.mxu0 %v1844
        %2120 = vmatmul.mubr.bf16.gmra.mxu0 %v1843
        %v2121 = vpop.f32.mrf.mxu0
        %v2122 = vadd.f32 %v1890, %v2121
        %v2123 = vpop.f32.mrf.mxu0
        %v2124 = vadd.f32 %v1894, %v2123
        %v2125 = vpop.f32.mrf.mxu0
        %v2126 = vadd.f32 %v1890, %v2125
        %v2127 = vpop.f32.mrf.mxu0
        %v2128 = vadd.f32 %v1894, %v2127
        %2129 = vmatprep.mubr.bf16.mxu0 %v1846
        %2130 = vmatmul.mubr.bf16.gmra.mxu0 %v1845
        %v2131 = vpop.f32.mrf.mxu0
        %v2132 = vadd.f32 %v1890, %v2131
        %v2133 = vpop.f32.mrf.mxu0
        %v2134 = vadd.f32 %v1894, %v2133
        %v2135 = vpop.f32.mrf.mxu0
        %v2136 = vadd.f32 %v1890, %v2135
        %v2137 = vpop.f32.mrf.mxu0
        %v2138 = vadd.f32 %v1894, %v2137
        %2139 = vmatprep.mubr.bf16.mxu0 %v1848
        %2140 = vmatmul.mubr.bf16.gmra.mxu0 %v1847
        %v2141 = vpop.f32.mrf.mxu0
        %v2142 = vadd.f32 %v1890, %v2141
        %v2143 = vpop.f32.mrf.mxu0
        %v2144 = vadd.f32 %v1894, %v2143
        %v2145 = vpop.f32.mrf.mxu0
        %v2146 = vadd.f32 %v1890, %v2145
        %v2147 = vpop.f32.mrf.mxu0
        %v2148 = vadd.f32 %v1894, %v2147
        %2149 = vmatprep.mubr.bf16.mxu0 %v1850
        %2150 = vmatmul.mubr.bf16.gmra.mxu0 %v1849
        %v2151 = vpop.f32.mrf.mxu0
        %v2152 = vadd.f32 %v1890, %v2151
        %v2153 = vpop.f32.mrf.mxu0
        %v2154 = vadd.f32 %v1894, %v2153
        %v2155 = vpop.f32.mrf.mxu0
        %v2156 = vadd.f32 %v1890, %v2155
        %v2157 = vpop.f32.mrf.mxu0
        %v2158 = vadd.f32 %v1894, %v2157
        %2159 = vmatprep.mubr.bf16.mxu0 %v1852
        %2160 = vmatmul.mubr.bf16.gmra.mxu0 %v1851
        %v2161 = vpop.f32.mrf.mxu0
        %v2162 = vadd.f32 %v1890, %v2161
        %v2163 = vpop.f32.mrf.mxu0
        %v2164 = vadd.f32 %v1894, %v2163
        %v2165 = vpop.f32.mrf.mxu0
        %v2166 = vadd.f32 %v1890, %v2165
        %v2167 = vpop.f32.mrf.mxu0
        %v2168 = vadd.f32 %v1894, %v2167
        %2169 = vdwg.mxu0
        %2170 = vst [vmem:[%s367] sm:$0xff] %v2092
        %2171 = vst [vmem:[%s367 + $0x8] sm:$0xff] %v2094
        %2172 = vst [vmem:[%s367 + $0x10] sm:$0xff] %v2096
        %2173 = vst [vmem:[%s367 + $0x18] sm:$0xff] %v2098
        %2174 = vst [vmem:[%s367 + $0x20] sm:$0xff] %v2102
        %2175 = vst [vmem:[%s367 + $0x28] sm:$0xff] %v2104
        %2176 = vst [vmem:[%s367 + $0x30] sm:$0xff] %v2106
        %2177 = vst [vmem:[%s367 + $0x38] sm:$0xff] %v2108
        %2178 = vst [vmem:[%s367 + $0x40] sm:$0xff] %v2112
        %2179 = vst [vmem:[%s367 + $0x48] sm:$0xff] %v2114
        %2180 = vst [vmem:[%s367 + $0x50] sm:$0xff] %v2116
        %2181 = vst [vmem:[%s367 + $0x58] sm:$0xff] %v2118
        %2182 = vst [vmem:[%s367 + $0x60] sm:$0xff] %v2122
        %2183 = vst [vmem:[%s367 + $0x68] sm:$0xff] %v2124
        %2184 = vst [vmem:[%s367 + $0x70] sm:$0xff] %v2126
        %2185 = vst [vmem:[%s367 + $0x78] sm:$0xff] %v2128
        %2186 = vst [vmem:[%s367 + $0x80] sm:$0xff] %v2132
        %2187 = vst [vmem:[%s367 + $0x88] sm:$0xff] %v2134
        %2188 = vst [vmem:[%s367 + $0x90] sm:$0xff] %v2136
        %2189 = vst [vmem:[%s367 + $0x98] sm:$0xff] %v2138
        %2190 = vst [vmem:[%s367 + $0xa0] sm:$0xff] %v2142
        %2191 = vst [vmem:[%s367 + $0xa8] sm:$0xff] %v2144
        %2192 = vst [vmem:[%s367 + $0xb0] sm:$0xff] %v2146
        %2193 = vst [vmem:[%s367 + $0xb8] sm:$0xff] %v2148
        %2194 = vst [vmem:[%s367 + $0xc0] sm:$0xff] %v2152
        %2195 = vst [vmem:[%s367 + $0xc8] sm:$0xff] %v2154
        %2196 = vst [vmem:[%s367 + $0xd0] sm:$0xff] %v2156
        %2197 = vst [vmem:[%s367 + $0xd8] sm:$0xff] %v2158
        %2198 = vst [vmem:[%s367 + $0xe0] sm:$0xff] %v2162
        %2199 = vst [vmem:[%s367 + $0xe8] sm:$0xff] %v2164
        %2200 = vst [vmem:[%s367 + $0xf0] sm:$0xff] %v2166
        %2201 = vst [vmem:[%s367 + $0xf8] sm:$0xff] %v2168
        %s2202 = sand.u32 %s252, 1
        %s2203 = scalar_lea.sflag [#allocation3], %s2202
        %s2204 = sand.u32 %s252, 1
        %s2205 = smul.addr %s2204, 256
        %s2206 = scalar_lea.vmem [#allocation2], %s2205
        // Predicated region
        $region61: #{net_comp_gcn.1} parent=59 // pred_check
          %p2207 = pneg %p262
        $region62: #{net_comp_gcn.1} parent=59 // pred_check_branch
          %2209 = sbr.rel (%p2207) target = $region64
        $region63: #{net_comp_gcn.1} parent=59 // pred_region
          %s2211 = ssub.s32 4096, 4096
          %2212 = vsyncadd %s2203, %s2211
          %s2213 = smul.addr %s24, 32
          %s2214 = smul.addr %s2213, 128
          %s2215 = scalar_lea.hbm %s10, %s2214
          %s2216 = sshll.u32 %s2206, 4
          %s2217 = int_to_ptr.vmem [resolvable:$true] %s2216
          %2222 = dma.vmem_to_hbm [thread:$0]  %s2217, 4096, %s2215, %s2203, 256, 256, 16
        $region64: #{net_comp_gcn.1} parent=59 // pred_fallthru
          _
      $region60: #{net_comp_gcn.1} parent=5 // pred_fallthru
        _
      %p2223 = scmp.le.s32.totalorder 2, %s19
      // Predicated region
      $region65: #{net_comp_gcn.1} parent=5 // pred_check
        %p2224 = pneg %p2223
      $region66: #{net_comp_gcn.1} parent=5 // pred_check_branch
        %2226 = sbr.rel (%p2224) target = $region68
      $region67: #{net_comp_gcn.1} parent=5 // pred_region
        %s2227 = ssub.s32 %s19, 2
        // Predicated region
        $region69: #{net_comp_gcn.1} parent=67 // pred_check
          %p2228 = pneg %p268
        $region70: #{net_comp_gcn.1} parent=67 // pred_check_branch
          %2230 = sbr.rel (%p2228) target = $region72
        $region71: #{net_comp_gcn.1} parent=67 // pred_region
          %s2231 = sand.u32 %s253, 1
          %s2232 = scalar_lea.sflag [#allocation3], %s2231
          %s2233 = sand.u32 %s253, 1
          %s2234 = smul.addr %s2233, 256
          %s2235 = scalar_lea.vmem [#allocation2], %s2234
          %2236 = dma.done %s2232, 4096
        $region72: #{net_comp_gcn.1} parent=67 // pred_fallthru
          _
      $region68: #{net_comp_gcn.1} parent=5 // pred_fallthru
        _
    $region6: #{net_comp_gcn.1} parent=1 // loop_footer
      %s23 = sadd.s32 1, %s19
    $region7: #{net_comp_gcn.1} parent=1 // loop_footer_branch
      %18 = sbr.rel target = $region3
    $region8: #{net_comp_gcn.1} parent=1 // loop_exit
      _
    %2237 = vsyncpa [#allocation3], 1
    %s2238 = scalar_lea.sflag [#allocation3], 1
    %2239 = vsyncpa %s2238, 1

</llo_original>
